<compile_context>
chip_gen: v7x
topology: tpu7x:2x2x1
jax: 0.10.0
libtpu: 0.0.40
codegen_flags: <defaults>
</compile_context>

<pallas_src>
import functools

import jax
import jax.numpy as jnp
from jax.experimental import pallas as pl
from jax.experimental.pallas import tpu as pltpu

EPS = 1e-5
LANE = 128
_FALLBACK_VMEM_LIMIT = 48 * 1024 * 1024   # safe on every generation (v7x: 64 MiB phys)


def _round_up(a, b):
    return (a + b - 1) // b * b


def _vmem_limit_bytes():
    # v5e/v6e have 128 MiB physical VMEM, v7x has 64 MiB: use ~75% of whatever
    # the chip reports (capped), fall back to a universally safe value.
    try:
        cap = int(pltpu.get_tpu_info().vmem_capacity_bytes)
        return min(cap * 3 // 4, 100 * 1024 * 1024)
    except Exception:
        return _FALLBACK_VMEM_LIMIT


# ---------------------------------------------------------------------------
# Kernel for passes 1 & 2:  [optional bn+relu] -> conv1d('same') -> partial sums
# ---------------------------------------------------------------------------
def _conv_bn_partial_kernel(x_ref, w_ref, scale_ref, bias_ref,
                            h_ref, sums_ref, xp_ref, *,
                            apply_act, mask_batch, n_valid, base, l_stride):
    TN, L, Cp = x_ref.shape
    K = w_ref.shape[0]
    pad = (K - 1) // 2
    gap = l_stride - L                      # >= pad by construction
    total_rows = xp_ref.shape[0]

    if apply_act:
        scale = scale_ref[...]              # (1, Cp) -- hoisted out of the loop
        bias = bias_ref[...]

    # Zero only the rows the conv taps actually read but the interior writes
    # below do not cover (per-sample halos / slack), never the full buffer.
    if gap > 0:
        zeros_gap = jnp.zeros((gap, Cp), xp_ref.dtype)
    if pad > 0:
        xp_ref[pl.ds(base - pad, pad), :] = jnp.zeros((pad, Cp), xp_ref.dtype)
    tail = total_rows - (base + TN * l_stride)
    if tail > 0:
        xp_ref[pl.ds(base + TN * l_stride, tail), :] = \
            jnp.zeros((tail, Cp), xp_ref.dtype)

    # Stage the whole (TN, L, Cp) block into one padded VMEM slab so the conv
    # below is ONE big MXU matmul per tap (M = TN * l_stride), not TN small
    # per-sample matmuls.  Interior rows are 8-aligned (base, l_stride % 8 == 0).
    for i in range(TN):
        row = base + i * l_stride
        a = x_ref[i]                                        # (L, Cp)
        if apply_act:                                       # folded bn + relu
            a = jnp.maximum(a.astype(jnp.float32) * scale + bias, 0.0)
            if mask_batch:                                  # padded batch rows -> 0
                gidx = pl.program_id(0) * TN + i
                a = jnp.where(gidx < n_valid, a, jnp.zeros_like(a))
        xp_ref[pl.ds(row, L), :] = a.astype(xp_ref.dtype)
        if gap > 0:
            xp_ref[pl.ds(row + L, gap), :] = zeros_gap

    # conv1d('same'): K MXU matmuls over the full slab, f32 accumulation.
    M = TN * l_stride
    acc = None
    for k in range(K):                                      # small tap loop
        part = jnp.dot(xp_ref[pl.ds(base - pad + k, M), :], w_ref[k],
                       preferred_element_type=jnp.float32)
        acc = part if acc is None else acc + part

    # Per-sample output rows sit at [i*l_stride, i*l_stride + L); halo/slack
    # rows are discarded by the slice.
    h = acc.reshape(TN, l_stride, Cp)[:, :L, :]             # (TN, L, Cp) f32
    h_ref[...] = h.astype(h_ref.dtype)

    # Per-block partial sums for the one-pass BatchNorm statistics (f32).
    s = jnp.sum(jnp.sum(h, axis=1), axis=0, keepdims=True)        # (1, Cp)
    ss = jnp.sum(jnp.sum(h * h, axis=1), axis=0, keepdims=True)   # (1, Cp)
    sums_ref[0] = jnp.concatenate([s, ss], axis=0)                # (2, Cp)


def _conv_stats_pass(x, w, scale, bias, *, apply_act, mask_batch, n_valid,
                     tn, h_dtype, vmem_limit):
    Np, L, Cp = x.shape
    K = w.shape[0]
    pad = (K - 1) // 2
    nb = Np // tn
    base = _round_up(max(pad, 1), 8)        # 8-aligned start of sample 0 interior
    l_stride = _round_up(L + pad, 8)        # per-sample stride in the slab
    total_rows = _round_up(base + pad + tn * l_stride, 8)

    kernel = functools.partial(
        _conv_bn_partial_kernel, apply_act=apply_act, mask_batch=mask_batch,
        n_valid=n_valid, base=base, l_stride=l_stride)
    return pl.pallas_call(
        kernel,
        out_shape=(jax.ShapeDtypeStruct((Np, L, Cp), h_dtype),
                   jax.ShapeDtypeStruct((nb, 2, Cp), jnp.float32)),
        grid_spec=pltpu.PrefetchScalarGridSpec(
            num_scalar_prefetch=0,
            grid=(nb,),
            in_specs=[
                pl.BlockSpec((tn, L, Cp), lambda n: (n, 0, 0)),
                pl.BlockSpec((K, Cp, Cp), lambda n: (0, 0, 0)),
                pl.BlockSpec((1, Cp), lambda n: (0, 0)),
                pl.BlockSpec((1, Cp), lambda n: (0, 0)),
            ],
            out_specs=(
                pl.BlockSpec((tn, L, Cp), lambda n: (n, 0, 0)),
                pl.BlockSpec((1, 2, Cp), lambda n: (n, 0, 0)),
            ),
            scratch_shapes=[pltpu.VMEM((total_rows, Cp), w.dtype)],
        ),
        compiler_params=pltpu.CompilerParams(
            dimension_semantics=("parallel",),
            vmem_limit_bytes=vmem_limit),
    )(x, w, scale, bias)


# ---------------------------------------------------------------------------
# Kernel for pass 3:  bn2 (folded affine) + residual add + relu
# ---------------------------------------------------------------------------
def _bn_add_relu_kernel(h_ref, x_ref, scale_ref, bias_ref, o_ref):
    h = h_ref[...].astype(jnp.float32)
    x = x_ref[...].astype(jnp.float32)
    o_ref[...] = jnp.maximum(h * scale_ref[...] + bias_ref[...] + x,
                             0.0).astype(o_ref.dtype)


def _bn_add_relu_pass(h, x, scale, bias, out_dtype, *, tn, vmem_limit):
    Np, L, Cp = h.shape
    nb = Np // tn
    return pl.pallas_call(
        _bn_add_relu_kernel,
        out_shape=jax.ShapeDtypeStruct((Np, L, Cp), out_dtype),
        grid_spec=pltpu.PrefetchScalarGridSpec(
            num_scalar_prefetch=0,
            grid=(nb,),
            in_specs=[
                pl.BlockSpec((tn, L, Cp), lambda n: (n, 0, 0)),
                pl.BlockSpec((tn, L, Cp), lambda n: (n, 0, 0)),
                pl.BlockSpec((1, Cp), lambda n: (0, 0)),
                pl.BlockSpec((1, Cp), lambda n: (0, 0)),
            ],
            out_specs=pl.BlockSpec((tn, L, Cp), lambda n: (n, 0, 0)),
        ),
        compiler_params=pltpu.CompilerParams(
            dimension_semantics=("parallel",),
            vmem_limit_bytes=vmem_limit),
    )(h, x, scale, bias)


# ---------------------------------------------------------------------------
# Full BasicBlock1d forward
# ---------------------------------------------------------------------------
@functools.partial(jax.jit, static_argnames=("block_n", "conv_dtype"))
def basic_block1d(x_ncl, w1_oik, w2_oik, g1, b1, g2, b2, *,
                  block_n=8, conv_dtype=jnp.bfloat16):
    """BasicBlock1d forward.

    x_ncl:   (N, C, L) activations (PyTorch NCL layout).
    w*_oik:  (Cout, Cin, K) conv weights (PyTorch layout), bias-free.
    g*, b*:  (C,) BatchNorm affine parameters (training-mode batch stats).
    conv_dtype: dtype of the conv matmuls and of the stored intermediates.
      bfloat16 (default) is MXU-native and halves HBM traffic; BN statistics
      and all accumulation stay in f32.  jnp.float32 gives strict parity with
      the PyTorch reference.
    """
    N, C, L = x_ncl.shape
    K1 = w1_oik.shape[2]
    K2 = w2_oik.shape[2]
    if K1 % 2 != 1 or K2 % 2 != 1:
        raise NotImplementedError("even conv kernel sizes not supported")
    if (w1_oik.shape[0] != C or w1_oik.shape[1] != C
            or w2_oik.shape[0] != C or w2_oik.shape[1] != C):
        raise NotImplementedError("downsample / inplanes != planes not supported")

    Cp = _round_up(C, LANE)
    pc = Cp - C
    # TODO(synk): for C well below 128 the channel pad wastes HBM/MXU by Cp/C;
    # an NCL-native layout would avoid it (acceptable at production C ~ 128).

    # Batch tiling: pad N up to a multiple of TN (no divisor search), and pick
    # TN so there are >= 2 "parallel" grid blocks whenever N >= 2 (v7x has two
    # TensorCores).  Padded samples are zero and masked out of the BN stats.
    TN = max(1, min(block_n, pl.cdiv(N, 2)))
    Np = _round_up(N, TN)
    nb = Np // TN
    mask_batch = Np > N
    del nb  # derived again inside the pass helpers

    vmem_limit = _vmem_limit_bytes()

    # ---- layout glue: NCL -> NLC, pad channel axis to 128, pad batch --------
    # TODO(synk): these transposes/pads are full-tensor XLA HBM passes; folding
    # them into pass 1 / pass 3 would remove ~2-3 passes of a mem-bound block.
    x_nlc = jnp.transpose(x_ncl, (0, 2, 1))                     # (N, L, C)
    x_nlc = jnp.pad(x_nlc, ((0, Np - N), (0, 0), (0, pc)))
    x_nlc = x_nlc.astype(conv_dtype)       # bf16 halves x HBM traffic (residual too)

    w1 = jnp.transpose(w1_oik, (2, 1, 0))                       # (K, Cin, Cout)
    w2 = jnp.transpose(w2_oik, (2, 1, 0))
    if pc:
        w1 = jnp.pad(w1, ((0, 0), (0, pc), (0, pc)))
        w2 = jnp.pad(w2, ((0, 0), (0, pc), (0, pc)))
    w1 = w1.astype(conv_dtype)
    w2 = w2.astype(conv_dtype)

    def pad_c(p):
        p = p.astype(jnp.float32)
        return jnp.pad(p, (0, pc)) if pc else p

    g1p, b1p, g2p, b2p = pad_c(g1), pad_c(b1), pad_c(g2), pad_c(b2)

    inv_cnt = 1.0 / float(N * L)

    def stats_to_affine(psums, gamma, beta):
        s = jnp.sum(psums[:, 0, :], axis=0)
        ss = jnp.sum(psums[:, 1, :], axis=0)
        mean = s * inv_cnt
        var = jnp.maximum(ss * inv_cnt - mean * mean, 0.0)      # biased (training) var
        scale = gamma * jax.lax.rsqrt(var + EPS)
        bias = beta - mean * scale
        return scale.reshape(1, Cp), bias.reshape(1, Cp)

    dummy = jnp.zeros((1, Cp), jnp.float32)
    h_dtype = conv_dtype                    # bf16 intermediates by default

    # pass 1: conv1 + per-block sums (padded batch rows are zero -> no mask needed)
    h1, psum1 = _conv_stats_pass(
        x_nlc, w1, dummy, dummy, apply_act=False, mask_batch=False, n_valid=N,
        tn=TN, h_dtype=h_dtype, vmem_limit=vmem_limit)
    scale1, bias1 = stats_to_affine(psum1, g1p, b1p)

    # pass 2: bn1 + relu + conv2 + per-block sums (mask padded batch rows)
    h2, psum2 = _conv_stats_pass(
        h1, w2, scale1, bias1, apply_act=True, mask_batch=mask_batch, n_valid=N,
        tn=TN, h_dtype=h_dtype, vmem_limit=vmem_limit)
    scale2, bias2 = stats_to_affine(psum2, g2p, b2p)

    # pass 3: bn2 + residual add + relu
    out_nlc = _bn_add_relu_pass(h2, x_nlc, scale2, bias2, x_ncl.dtype,
                                tn=TN, vmem_limit=vmem_limit)

    out_nlc = out_nlc[:N, :, :C]                                # drop batch/channel pad
    return jnp.transpose(out_nlc, (0, 2, 1))                    # back to (N, C, L)


# ---------------- pure-JAX reference (for correctness check) ----------------
def reference_forward(x_ncl, w1_oik, w2_oik, g1, b1, g2, b2):
    def conv1d(x, w):
        p = (w.shape[2] - 1) // 2
        return jax.lax.conv_general_dilated(
            x, w, window_strides=(1,), padding=[(p, p)],
            dimension_numbers=("NCH", "OIH", "NCH"))

    def bn_train(x, g, b):
        mean = jnp.mean(x, axis=(0, 2), keepdims=True)
        var = jnp.mean((x - mean) ** 2, axis=(0, 2), keepdims=True)
        return (x - mean) * jax.lax.rsqrt(var + EPS) * g.reshape(1, -1, 1) \
            + b.reshape(1, -1, 1)

    out = conv1d(x_ncl, w1_oik)
    out = jnp.maximum(bn_train(out, g1, b1), 0.0)
    out = conv1d(out, w2_oik)
    out = bn_train(out, g2, b2)
    return jnp.maximum(out + x_ncl, 0.0)


if __name__ == "__main__":
    N, C, L = 2, 8, 16          # batch, channels (inplanes == planes), length
    K1, K2 = 3, 3               # kernel_size=[3, 3]

    key = jax.random.PRNGKey(0)
    kx, kw1, kw2, kg1, kb1, kg2, kb2 = jax.random.split(key, 7)

    x = jax.random.normal(kx, (N, C, L), dtype=jnp.float32)
    # conv weights in PyTorch layout (out_channels, in_channels, kernel_size)
    w1 = 0.3 * jax.random.normal(kw1, (C, C, K1), dtype=jnp.float32)
    w2 = 0.3 * jax.random.normal(kw2, (C, C, K2), dtype=jnp.float32)
    # batchnorm affine params (deterministic, non-trivial)
    g1 = 1.0 + 0.1 * jax.random.normal(kg1, (C,), dtype=jnp.float32)
    b1 = 0.1 * jax.random.normal(kb1, (C,), dtype=jnp.float32)
    g2 = 1.0 + 0.1 * jax.random.normal(kg2, (C,), dtype=jnp.float32)
    b2 = 0.1 * jax.random.normal(kb2, (C,), dtype=jnp.float32)

    ref = reference_forward(x, w1, w2, g1, b1, g2, b2)

    # 1) default bf16 MXU + bf16 intermediate path (fast path)
    out_bf16 = jax.block_until_ready(basic_block1d(x, w1, w2, g1, b1, g2, b2))
    assert out_bf16.shape == (N, C, L)
    err_bf16 = float(jnp.max(jnp.abs(out_bf16 - ref)))
    assert err_bf16 < 1e-1, f"bf16 path max abs err {err_bf16}"

    # 2) strict f32 parity path
    out_f32 = jax.block_until_ready(
        basic_block1d(x, w1, w2, g1, b1, g2, b2, conv_dtype=jnp.float32))
    assert jnp.allclose(out_f32, ref, rtol=2e-4, atol=2e-4), \
        f"f32 path max abs err {float(jnp.max(jnp.abs(out_f32 - ref)))}"

    # 3) odd batch (exercises batch padding + BN-stat masking), strict f32 check
    N2 = 3
    x2 = jax.random.normal(jax.random.fold_in(kx, 1), (N2, C, L), dtype=jnp.float32)
    ref2 = reference_forward(x2, w1, w2, g1, b1, g2, b2)
    out2 = jax.block_until_ready(
        basic_block1d(x2, w1, w2, g1, b1, g2, b2, conv_dtype=jnp.float32))
    assert out2.shape == (N2, C, L)
    assert jnp.allclose(out2, ref2, rtol=2e-4, atol=2e-4), \
        f"padded-batch path max abs err {float(jnp.max(jnp.abs(out2 - ref2)))}"

    print("KERNEL_OK")
</pallas_src>

<mosaic_0001>
module attributes {stable_mosaic.version = 11 : i64} {
  func.func @_conv_bn_partial_kernel(%arg0: i32, %arg1: memref<1x16x128xbf16, #tpu.memory_space<vmem>>, %arg2: memref<3x128x128xbf16, #tpu.memory_space<vmem>>, %arg3: memref<1x128xf32, #tpu.memory_space<vmem>>, %arg4: memref<1x128xf32, #tpu.memory_space<vmem>>, %arg5: memref<1x16x128xbf16, #tpu.memory_space<vmem>>, %arg6: memref<1x2x128xf32, #tpu.memory_space<vmem>>, %arg7: memref<40x128xbf16, #tpu.memory_space<vmem>>) attributes {dimension_semantics = [#tpu.dimension_semantics<parallel>], iteration_bounds = array<i64: 2>, scalar_prefetch = 0 : i64, scratch_operands = 1 : i64, tpu.core_type = #tpu.core_type<tc>, window_params = [{transform_indices = @transform_0, window_bounds = array<i64: 1, 16, 128>}, {pipeline_mode = #tpu.pipeline_mode<synchronous>, transform_indices = @transform_1, window_bounds = array<i64: 3, 128, 128>}, {pipeline_mode = #tpu.pipeline_mode<synchronous>, transform_indices = @transform_2, window_bounds = array<i64: 1, 128>}, {pipeline_mode = #tpu.pipeline_mode<synchronous>, transform_indices = @transform_3, window_bounds = array<i64: 1, 128>}, {transform_indices = @transform_4, window_bounds = array<i64: 1, 16, 128>}, {transform_indices = @transform_5, window_bounds = array<i64: 1, 2, 128>}]} {
    %cst = arith.constant 0.000000e+00 : bf16
    %0 = vector.broadcast %cst : bf16 to vector<8x128xbf16>
    %cst_0 = arith.constant 0.000000e+00 : bf16
    %1 = vector.broadcast %cst_0 : bf16 to vector<1x128xbf16>
    %c7 = arith.constant 7 : index
    %c0 = arith.constant 0 : index
    %2 = vector.load %arg7[%c7, %c0] : memref<40x128xbf16, #tpu.memory_space<vmem>>, vector<1x128xbf16>
    tpu.vector_store %arg7[%c7, %c0], %1 {strides = array<i32>} : memref<40x128xbf16, #tpu.memory_space<vmem>>, vector<1x128xbf16>,
    %cst_1 = arith.constant 0.000000e+00 : bf16
    %3 = vector.broadcast %cst_1 : bf16 to vector<8x128xbf16>
    %c32 = arith.constant 32 : index
    %c0_2 = arith.constant 0 : index
    %4 = vector.load %arg7[%c32, %c0_2] : memref<40x128xbf16, #tpu.memory_space<vmem>>, vector<8x128xbf16>
    tpu.vector_store %arg7[%c32, %c0_2], %3 {strides = array<i32>} : memref<40x128xbf16, #tpu.memory_space<vmem>>, vector<8x128xbf16>,
    %c0_3 = arith.constant 0 : index
    %c0_4 = arith.constant 0 : index
    %c0_5 = arith.constant 0 : index
    %5 = vector.load %arg1[%c0_3, %c0_4, %c0_5] : memref<1x16x128xbf16, #tpu.memory_space<vmem>>, vector<1x16x128xbf16>
    %6 = vector.shape_cast %5 : vector<1x16x128xbf16> to vector<16x128xbf16>
    %c8 = arith.constant 8 : index
    %c0_6 = arith.constant 0 : index
    %7 = vector.load %arg7[%c8, %c0_6] : memref<40x128xbf16, #tpu.memory_space<vmem>>, vector<16x128xbf16>
    tpu.vector_store %arg7[%c8, %c0_6], %6 {strides = array<i32>} : memref<40x128xbf16, #tpu.memory_space<vmem>>, vector<16x128xbf16>,
    %c24 = arith.constant 24 : index
    %c0_7 = arith.constant 0 : index
    %8 = vector.load %arg7[%c24, %c0_7] : memref<40x128xbf16, #tpu.memory_space<vmem>>, vector<8x128xbf16>
    tpu.vector_store %arg7[%c24, %c0_7], %0 {strides = array<i32>} : memref<40x128xbf16, #tpu.memory_space<vmem>>, vector<8x128xbf16>,
    %c7_8 = arith.constant 7 : index
    %c0_9 = arith.constant 0 : index
    %9 = vector.load %arg7[%c7_8, %c0_9] : memref<40x128xbf16, #tpu.memory_space<vmem>>, vector<24x128xbf16>
    %c0_10 = arith.constant 0 : index
    %c0_11 = arith.constant 0 : index
    %c0_12 = arith.constant 0 : index
    %10 = vector.load %arg2[%c0_10, %c0_11, %c0_12] : memref<3x128x128xbf16, #tpu.memory_space<vmem>>, vector<1x128x128xbf16>
    %11 = vector.shape_cast %10 : vector<1x128x128xbf16> to vector<128x128xbf16>
    %cst_13 = arith.constant dense<0.000000e+00> : vector<24x128xf32>
    %12 = tpu.matmul %9, %11, %cst_13 {dimension_numbers = #tpu.dot_dimension_numbers<[1], [0], [0], [1], [0, 0, 1, 1], [], []>} : vector<24x128xbf16>, vector<128x128xbf16>, vector<24x128xf32> -> vector<24x128xf32>
    %c8_14 = arith.constant 8 : index
    %c0_15 = arith.constant 0 : index
    %13 = vector.load %arg7[%c8_14, %c0_15] : memref<40x128xbf16, #tpu.memory_space<vmem>>, vector<24x128xbf16>
    %c1 = arith.constant 1 : index
    %c0_16 = arith.constant 0 : index
    %c0_17 = arith.constant 0 : index
    %14 = vector.load %arg2[%c1, %c0_16, %c0_17] : memref<3x128x128xbf16, #tpu.memory_space<vmem>>, vector<1x128x128xbf16>
    %15 = vector.shape_cast %14 : vector<1x128x128xbf16> to vector<128x128xbf16>
    %cst_18 = arith.constant dense<0.000000e+00> : vector<24x128xf32>
    %16 = tpu.matmul %13, %15, %cst_18 {dimension_numbers = #tpu.dot_dimension_numbers<[1], [0], [0], [1], [0, 0, 1, 1], [], []>} : vector<24x128xbf16>, vector<128x128xbf16>, vector<24x128xf32> -> vector<24x128xf32>
    %17 = arith.addf %12, %16 : vector<24x128xf32>
    %c9 = arith.constant 9 : index
    %c0_19 = arith.constant 0 : index
    %18 = vector.load %arg7[%c9, %c0_19] : memref<40x128xbf16, #tpu.memory_space<vmem>>, vector<24x128xbf16>
    %c2 = arith.constant 2 : index
    %c0_20 = arith.constant 0 : index
    %c0_21 = arith.constant 0 : index
    %19 = vector.load %arg2[%c2, %c0_20, %c0_21] : memref<3x128x128xbf16, #tpu.memory_space<vmem>>, vector<1x128x128xbf16>
    %20 = vector.shape_cast %19 : vector<1x128x128xbf16> to vector<128x128xbf16>
    %cst_22 = arith.constant dense<0.000000e+00> : vector<24x128xf32>
    %21 = tpu.matmul %18, %20, %cst_22 {dimension_numbers = #tpu.dot_dimension_numbers<[1], [0], [0], [1], [0, 0, 1, 1], [], []>} : vector<24x128xbf16>, vector<128x128xbf16>, vector<24x128xf32> -> vector<24x128xf32>
    %22 = arith.addf %17, %21 : vector<24x128xf32>
    %23 = vector.shape_cast %22 : vector<24x128xf32> to vector<1x24x128xf32>
    %24 = vector.extract_strided_slice %23 {offsets = [0, 0, 0], sizes = [1, 16, 128], strides = [1, 1, 1]} : vector<1x24x128xf32> to vector<1x16x128xf32>
    %25 = arith.truncf %24 : vector<1x16x128xf32> to vector<1x16x128xbf16>
    %c0_23 = arith.constant 0 : index
    %c0_24 = arith.constant 0 : index
    %c0_25 = arith.constant 0 : index
    %26 = vector.load %arg5[%c0_23, %c0_24, %c0_25] : memref<1x16x128xbf16, #tpu.memory_space<vmem>>, vector<1x16x128xbf16>
    tpu.vector_store %arg5[%c0_23, %c0_24, %c0_25], %25 {strides = array<i32>} : memref<1x16x128xbf16, #tpu.memory_space<vmem>>, vector<1x16x128xbf16>,
    %cst_26 = arith.constant dense<0.000000e+00> : vector<1x128xf32>
    %27 = vector.multi_reduction <add>, %24, %cst_26 [1] : vector<1x16x128xf32> to vector<1x128xf32>
    %cst_27 = arith.constant dense<0.000000e+00> : vector<128xf32>
    %28 = vector.multi_reduction <add>, %27, %cst_27 [0] : vector<1x128xf32> to vector<128xf32>
    %29 = vector.shape_cast %28 : vector<128xf32> to vector<1x128xf32>
    %30 = arith.mulf %24, %24 : vector<1x16x128xf32>
    %cst_28 = arith.constant dense<0.000000e+00> : vector<1x128xf32>
    %31 = vector.multi_reduction <add>, %30, %cst_28 [1] : vector<1x16x128xf32> to vector<1x128xf32>
    %cst_29 = arith.constant dense<0.000000e+00> : vector<128xf32>
    %32 = vector.multi_reduction <add>, %31, %cst_29 [0] : vector<1x128xf32> to vector<128xf32>
    %33 = vector.shape_cast %32 : vector<128xf32> to vector<1x128xf32>
    %34 = tpu.concatenate %29, %33 in 0 : vector<1x128xf32>, vector<1x128xf32> -> vector<2x128xf32>
    %c0_30 = arith.constant 0 : index
    %c0_31 = arith.constant 0 : index
    %c0_32 = arith.constant 0 : index
    %35 = vector.load %arg6[%c0_30, %c0_31, %c0_32] : memref<1x2x128xf32, #tpu.memory_space<vmem>>, vector<1x2x128xf32>
    %36 = vector.shape_cast %35 : vector<1x2x128xf32> to vector<2x128xf32>
    %37 = vector.shape_cast %34 : vector<2x128xf32> to vector<1x2x128xf32>
    tpu.vector_store %arg6[%c0_30, %c0_31, %c0_32], %37 {strides = array<i32>} : memref<1x2x128xf32, #tpu.memory_space<vmem>>, vector<1x2x128xf32>,
    return
  }
  func.func @transform_0(%arg0: i32) -> (i32, i32, i32) {
    %c0_i32 = arith.constant 0 : i32
    %c0_i32_0 = arith.constant 0 : i32
    %c0_i32_1 = arith.constant 0 : i32
    return %arg0, %c0_i32, %c0_i32_0 : i32, i32, i32
  }
  func.func @transform_1(%arg0: i32) -> (i32, i32, i32) {
    %c0_i32 = arith.constant 0 : i32
    %c0_i32_0 = arith.constant 0 : i32
    %c0_i32_1 = arith.constant 0 : i32
    %c0_i32_2 = arith.constant 0 : i32
    return %c0_i32, %c0_i32_0, %c0_i32_1 : i32, i32, i32
  }
  func.func @transform_2(%arg0: i32) -> (i32, i32) {
    %c0_i32 = arith.constant 0 : i32
    %c0_i32_0 = arith.constant 0 : i32
    %c0_i32_1 = arith.constant 0 : i32
    return %c0_i32, %c0_i32_0 : i32, i32
  }
  func.func @transform_3(%arg0: i32) -> (i32, i32) {
    %c0_i32 = arith.constant 0 : i32
    %c0_i32_0 = arith.constant 0 : i32
    %c0_i32_1 = arith.constant 0 : i32
    return %c0_i32, %c0_i32_0 : i32, i32
  }
  func.func @transform_4(%arg0: i32) -> (i32, i32, i32) {
    %c0_i32 = arith.constant 0 : i32
    %c0_i32_0 = arith.constant 0 : i32
    %c0_i32_1 = arith.constant 0 : i32
    return %arg0, %c0_i32, %c0_i32_0 : i32, i32, i32
  }
  func.func @transform_5(%arg0: i32) -> (i32, i32, i32) {
    %c0_i32 = arith.constant 0 : i32
    %c0_i32_0 = arith.constant 0 : i32
    %c0_i32_1 = arith.constant 0 : i32
    return %arg0, %c0_i32, %c0_i32_0 : i32, i32, i32
  }
}

module attributes {stable_mosaic.version = 11 : i64} {
  func.func @_bn_add_relu_kernel(%arg0: i32, %arg1: memref<1x16x128xbf16, #tpu.memory_space<vmem>>, %arg2: memref<1x16x128xbf16, #tpu.memory_space<vmem>>, %arg3: memref<1x128xf32, #tpu.memory_space<vmem>>, %arg4: memref<1x128xf32, #tpu.memory_space<vmem>>, %arg5: memref<1x16x128xf32, #tpu.memory_space<vmem>>) attributes {dimension_semantics = [#tpu.dimension_semantics<parallel>], iteration_bounds = array<i64: 2>, scalar_prefetch = 0 : i64, scratch_operands = 0 : i64, tpu.core_type = #tpu.core_type<tc>, window_params = [{transform_indices = @transform_0, window_bounds = array<i64: 1, 16, 128>}, {transform_indices = @transform_1, window_bounds = array<i64: 1, 16, 128>}, {pipeline_mode = #tpu.pipeline_mode<synchronous>, transform_indices = @transform_2, window_bounds = array<i64: 1, 128>}, {pipeline_mode = #tpu.pipeline_mode<synchronous>, transform_indices = @transform_3, window_bounds = array<i64: 1, 128>}, {transform_indices = @transform_4, window_bounds = array<i64: 1, 16, 128>}]} {
    %c0 = arith.constant 0 : index
    %c0_0 = arith.constant 0 : index
    %c0_1 = arith.constant 0 : index
    %0 = vector.load %arg1[%c0, %c0_0, %c0_1] : memref<1x16x128xbf16, #tpu.memory_space<vmem>>, vector<1x16x128xbf16>
    %1 = arith.extf %0 : vector<1x16x128xbf16> to vector<1x16x128xf32>
    %c0_2 = arith.constant 0 : index
    %c0_3 = arith.constant 0 : index
    %c0_4 = arith.constant 0 : index
    %2 = vector.load %arg2[%c0_2, %c0_3, %c0_4] : memref<1x16x128xbf16, #tpu.memory_space<vmem>>, vector<1x16x128xbf16>
    %3 = arith.extf %2 : vector<1x16x128xbf16> to vector<1x16x128xf32>
    %c0_5 = arith.constant 0 : index
    %c0_6 = arith.constant 0 : index
    %4 = vector.load %arg3[%c0_5, %c0_6] : memref<1x128xf32, #tpu.memory_space<vmem>>, vector<1x128xf32>
    %5 = vector.shape_cast %4 : vector<1x128xf32> to vector<1x1x128xf32>
    %6 = vector.broadcast %5 : vector<1x1x128xf32> to vector<1x16x128xf32>
    %7 = arith.mulf %1, %6 : vector<1x16x128xf32>
    %c0_7 = arith.constant 0 : index
    %c0_8 = arith.constant 0 : index
    %8 = vector.load %arg4[%c0_7, %c0_8] : memref<1x128xf32, #tpu.memory_space<vmem>>, vector<1x128xf32>
    %9 = vector.shape_cast %8 : vector<1x128xf32> to vector<1x1x128xf32>
    %10 = vector.broadcast %9 : vector<1x1x128xf32> to vector<1x16x128xf32>
    %11 = arith.addf %7, %10 : vector<1x16x128xf32>
    %12 = arith.addf %11, %3 : vector<1x16x128xf32>
    %cst = arith.constant 0.000000e+00 : f32
    %13 = vector.broadcast %cst : f32 to vector<1x16x128xf32>
    %14 = arith.maximumf %12, %13 : vector<1x16x128xf32>
    %c0_9 = arith.constant 0 : index
    %c0_10 = arith.constant 0 : index
    %c0_11 = arith.constant 0 : index
    %15 = vector.load %arg5[%c0_9, %c0_10, %c0_11] : memref<1x16x128xf32, #tpu.memory_space<vmem>>, vector<1x16x128xf32>
    tpu.vector_store %arg5[%c0_9, %c0_10, %c0_11], %14 {strides = array<i32>} : memref<1x16x128xf32, #tpu.memory_space<vmem>>, vector<1x16x128xf32>,
    return
  }
  func.func @transform_0(%arg0: i32) -> (i32, i32, i32) {
    %c0_i32 = arith.constant 0 : i32
    %c0_i32_0 = arith.constant 0 : i32
    %c0_i32_1 = arith.constant 0 : i32
    return %arg0, %c0_i32, %c0_i32_0 : i32, i32, i32
  }
  func.func @transform_1(%arg0: i32) -> (i32, i32, i32) {
    %c0_i32 = arith.constant 0 : i32
    %c0_i32_0 = arith.constant 0 : i32
    %c0_i32_1 = arith.constant 0 : i32
    return %arg0, %c0_i32, %c0_i32_0 : i32, i32, i32
  }
  func.func @transform_2(%arg0: i32) -> (i32, i32) {
    %c0_i32 = arith.constant 0 : i32
    %c0_i32_0 = arith.constant 0 : i32
    %c0_i32_1 = arith.constant 0 : i32
    return %c0_i32, %c0_i32_0 : i32, i32
  }
  func.func @transform_3(%arg0: i32) -> (i32, i32) {
    %c0_i32 = arith.constant 0 : i32
    %c0_i32_0 = arith.constant 0 : i32
    %c0_i32_1 = arith.constant 0 : i32
    return %c0_i32, %c0_i32_0 : i32, i32
  }
  func.func @transform_4(%arg0: i32) -> (i32, i32, i32) {
    %c0_i32 = arith.constant 0 : i32
    %c0_i32_0 = arith.constant 0 : i32
    %c0_i32_1 = arith.constant 0 : i32
    return %arg0, %c0_i32, %c0_i32_0 : i32, i32, i32
  }
}

module attributes {stable_mosaic.version = 11 : i64} {
  func.func @_conv_bn_partial_kernel(%arg0: i32, %arg1: memref<1x16x128xbf16, #tpu.memory_space<vmem>>, %arg2: memref<3x128x128xbf16, #tpu.memory_space<vmem>>, %arg3: memref<1x128xf32, #tpu.memory_space<vmem>>, %arg4: memref<1x128xf32, #tpu.memory_space<vmem>>, %arg5: memref<1x16x128xbf16, #tpu.memory_space<vmem>>, %arg6: memref<1x2x128xf32, #tpu.memory_space<vmem>>, %arg7: memref<40x128xbf16, #tpu.memory_space<vmem>>) attributes {dimension_semantics = [#tpu.dimension_semantics<parallel>], iteration_bounds = array<i64: 2>, scalar_prefetch = 0 : i64, scratch_operands = 1 : i64, tpu.core_type = #tpu.core_type<tc>, window_params = [{transform_indices = @transform_0, window_bounds = array<i64: 1, 16, 128>}, {pipeline_mode = #tpu.pipeline_mode<synchronous>, transform_indices = @transform_1, window_bounds = array<i64: 3, 128, 128>}, {pipeline_mode = #tpu.pipeline_mode<synchronous>, transform_indices = @transform_2, window_bounds = array<i64: 1, 128>}, {pipeline_mode = #tpu.pipeline_mode<synchronous>, transform_indices = @transform_3, window_bounds = array<i64: 1, 128>}, {transform_indices = @transform_4, window_bounds = array<i64: 1, 16, 128>}, {transform_indices = @transform_5, window_bounds = array<i64: 1, 2, 128>}]} {
    %c0 = arith.constant 0 : index
    %c0_0 = arith.constant 0 : index
    %0 = vector.load %arg3[%c0, %c0_0] : memref<1x128xf32, #tpu.memory_space<vmem>>, vector<1x128xf32>
    %c0_1 = arith.constant 0 : index
    %c0_2 = arith.constant 0 : index
    %1 = vector.load %arg4[%c0_1, %c0_2] : memref<1x128xf32, #tpu.memory_space<vmem>>, vector<1x128xf32>
    %cst = arith.constant 0.000000e+00 : bf16
    %2 = vector.broadcast %cst : bf16 to vector<8x128xbf16>
    %cst_3 = arith.constant 0.000000e+00 : bf16
    %3 = vector.broadcast %cst_3 : bf16 to vector<1x128xbf16>
    %c7 = arith.constant 7 : index
    %c0_4 = arith.constant 0 : index
    %4 = vector.load %arg7[%c7, %c0_4] : memref<40x128xbf16, #tpu.memory_space<vmem>>, vector<1x128xbf16>
    tpu.vector_store %arg7[%c7, %c0_4], %3 {strides = array<i32>} : memref<40x128xbf16, #tpu.memory_space<vmem>>, vector<1x128xbf16>,
    %cst_5 = arith.constant 0.000000e+00 : bf16
    %5 = vector.broadcast %cst_5 : bf16 to vector<8x128xbf16>
    %c32 = arith.constant 32 : index
    %c0_6 = arith.constant 0 : index
    %6 = vector.load %arg7[%c32, %c0_6] : memref<40x128xbf16, #tpu.memory_space<vmem>>, vector<8x128xbf16>
    tpu.vector_store %arg7[%c32, %c0_6], %5 {strides = array<i32>} : memref<40x128xbf16, #tpu.memory_space<vmem>>, vector<8x128xbf16>,
    %c0_7 = arith.constant 0 : index
    %c0_8 = arith.constant 0 : index
    %c0_9 = arith.constant 0 : index
    %7 = vector.load %arg1[%c0_7, %c0_8, %c0_9] : memref<1x16x128xbf16, #tpu.memory_space<vmem>>, vector<1x16x128xbf16>
    %8 = vector.shape_cast %7 : vector<1x16x128xbf16> to vector<16x128xbf16>
    %9 = arith.extf %8 : vector<16x128xbf16> to vector<16x128xf32>
    %10 = vector.broadcast %0 : vector<1x128xf32> to vector<16x128xf32>
    %11 = arith.mulf %9, %10 : vector<16x128xf32>
    %12 = vector.broadcast %1 : vector<1x128xf32> to vector<16x128xf32>
    %13 = arith.addf %11, %12 : vector<16x128xf32>
    %cst_10 = arith.constant 0.000000e+00 : f32
    %14 = vector.broadcast %cst_10 : f32 to vector<16x128xf32>
    %15 = arith.maximumf %13, %14 : vector<16x128xf32>
    %16 = arith.truncf %15 : vector<16x128xf32> to vector<16x128xbf16>
    %c8 = arith.constant 8 : index
    %c0_11 = arith.constant 0 : index
    %17 = vector.load %arg7[%c8, %c0_11] : memref<40x128xbf16, #tpu.memory_space<vmem>>, vector<16x128xbf16>
    tpu.vector_store %arg7[%c8, %c0_11], %16 {strides = array<i32>} : memref<40x128xbf16, #tpu.memory_space<vmem>>, vector<16x128xbf16>,
    %c24 = arith.constant 24 : index
    %c0_12 = arith.constant 0 : index
    %18 = vector.load %arg7[%c24, %c0_12] : memref<40x128xbf16, #tpu.memory_space<vmem>>, vector<8x128xbf16>
    tpu.vector_store %arg7[%c24, %c0_12], %2 {strides = array<i32>} : memref<40x128xbf16, #tpu.memory_space<vmem>>, vector<8x128xbf16>,
    %c7_13 = arith.constant 7 : index
    %c0_14 = arith.constant 0 : index
    %19 = vector.load %arg7[%c7_13, %c0_14] : memref<40x128xbf16, #tpu.memory_space<vmem>>, vector<24x128xbf16>
    %c0_15 = arith.constant 0 : index
    %c0_16 = arith.constant 0 : index
    %c0_17 = arith.constant 0 : index
    %20 = vector.load %arg2[%c0_15, %c0_16, %c0_17] : memref<3x128x128xbf16, #tpu.memory_space<vmem>>, vector<1x128x128xbf16>
    %21 = vector.shape_cast %20 : vector<1x128x128xbf16> to vector<128x128xbf16>
    %cst_18 = arith.constant dense<0.000000e+00> : vector<24x128xf32>
    %22 = tpu.matmul %19, %21, %cst_18 {dimension_numbers = #tpu.dot_dimension_numbers<[1], [0], [0], [1], [0, 0, 1, 1], [], []>} : vector<24x128xbf16>, vector<128x128xbf16>, vector<24x128xf32> -> vector<24x128xf32>
    %c8_19 = arith.constant 8 : index
    %c0_20 = arith.constant 0 : index
    %23 = vector.load %arg7[%c8_19, %c0_20] : memref<40x128xbf16, #tpu.memory_space<vmem>>, vector<24x128xbf16>
    %c1 = arith.constant 1 : index
    %c0_21 = arith.constant 0 : index
    %c0_22 = arith.constant 0 : index
    %24 = vector.load %arg2[%c1, %c0_21, %c0_22] : memref<3x128x128xbf16, #tpu.memory_space<vmem>>, vector<1x128x128xbf16>
    %25 = vector.shape_cast %24 : vector<1x128x128xbf16> to vector<128x128xbf16>
    %cst_23 = arith.constant dense<0.000000e+00> : vector<24x128xf32>
    %26 = tpu.matmul %23, %25, %cst_23 {dimension_numbers = #tpu.dot_dimension_numbers<[1], [0], [0], [1], [0, 0, 1, 1], [], []>} : vector<24x128xbf16>, vector<128x128xbf16>, vector<24x128xf32> -> vector<24x128xf32>
    %27 = arith.addf %22, %26 : vector<24x128xf32>
    %c9 = arith.constant 9 : index
    %c0_24 = arith.constant 0 : index
    %28 = vector.load %arg7[%c9, %c0_24] : memref<40x128xbf16, #tpu.memory_space<vmem>>, vector<24x128xbf16>
    %c2 = arith.constant 2 : index
    %c0_25 = arith.constant 0 : index
    %c0_26 = arith.constant 0 : index
    %29 = vector.load %arg2[%c2, %c0_25, %c0_26] : memref<3x128x128xbf16, #tpu.memory_space<vmem>>, vector<1x128x128xbf16>
    %30 = vector.shape_cast %29 : vector<1x128x128xbf16> to vector<128x128xbf16>
    %cst_27 = arith.constant dense<0.000000e+00> : vector<24x128xf32>
    %31 = tpu.matmul %28, %30, %cst_27 {dimension_numbers = #tpu.dot_dimension_numbers<[1], [0], [0], [1], [0, 0, 1, 1], [], []>} : vector<24x128xbf16>, vector<128x128xbf16>, vector<24x128xf32> -> vector<24x128xf32>
    %32 = arith.addf %27, %31 : vector<24x128xf32>
    %33 = vector.shape_cast %32 : vector<24x128xf32> to vector<1x24x128xf32>
    %34 = vector.extract_strided_slice %33 {offsets = [0, 0, 0], sizes = [1, 16, 128], strides = [1, 1, 1]} : vector<1x24x128xf32> to vector<1x16x128xf32>
    %35 = arith.truncf %34 : vector<1x16x128xf32> to vector<1x16x128xbf16>
    %c0_28 = arith.constant 0 : index
    %c0_29 = arith.constant 0 : index
    %c0_30 = arith.constant 0 : index
    %36 = vector.load %arg5[%c0_28, %c0_29, %c0_30] : memref<1x16x128xbf16, #tpu.memory_space<vmem>>, vector<1x16x128xbf16>
    tpu.vector_store %arg5[%c0_28, %c0_29, %c0_30], %35 {strides = array<i32>} : memref<1x16x128xbf16, #tpu.memory_space<vmem>>, vector<1x16x128xbf16>,
    %cst_31 = arith.constant dense<0.000000e+00> : vector<1x128xf32>
    %37 = vector.multi_reduction <add>, %34, %cst_31 [1] : vector<1x16x128xf32> to vector<1x128xf32>
    %cst_32 = arith.constant dense<0.000000e+00> : vector<128xf32>
    %38 = vector.multi_reduction <add>, %37, %cst_32 [0] : vector<1x128xf32> to vector<128xf32>
    %39 = vector.shape_cast %38 : vector<128xf32> to vector<1x128xf32>
    %40 = arith.mulf %34, %34 : vector<1x16x128xf32>
    %cst_33 = arith.constant dense<0.000000e+00> : vector<1x128xf32>
    %41 = vector.multi_reduction <add>, %40, %cst_33 [1] : vector<1x16x128xf32> to vector<1x128xf32>
    %cst_34 = arith.constant dense<0.000000e+00> : vector<128xf32>
    %42 = vector.multi_reduction <add>, %41, %cst_34 [0] : vector<1x128xf32> to vector<128xf32>
    %43 = vector.shape_cast %42 : vector<128xf32> to vector<1x128xf32>
    %44 = tpu.concatenate %39, %43 in 0 : vector<1x128xf32>, vector<1x128xf32> -> vector<2x128xf32>
    %c0_35 = arith.constant 0 : index
    %c0_36 = arith.constant 0 : index
    %c0_37 = arith.constant 0 : index
    %45 = vector.load %arg6[%c0_35, %c0_36, %c0_37] : memref<1x2x128xf32, #tpu.memory_space<vmem>>, vector<1x2x128xf32>
    %46 = vector.shape_cast %45 : vector<1x2x128xf32> to vector<2x128xf32>
    %47 = vector.shape_cast %44 : vector<2x128xf32> to vector<1x2x128xf32>
    tpu.vector_store %arg6[%c0_35, %c0_36, %c0_37], %47 {strides = array<i32>} : memref<1x2x128xf32, #tpu.memory_space<vmem>>, vector<1x2x128xf32>,
    return
  }
  func.func @transform_0(%arg0: i32) -> (i32, i32, i32) {
    %c0_i32 = arith.constant 0 : i32
    %c0_i32_0 = arith.constant 0 : i32
    %c0_i32_1 = arith.constant 0 : i32
    return %arg0, %c0_i32, %c0_i32_0 : i32, i32, i32
  }
  func.func @transform_1(%arg0: i32) -> (i32, i32, i32) {
    %c0_i32 = arith.constant 0 : i32
    %c0_i32_0 = arith.constant 0 : i32
    %c0_i32_1 = arith.constant 0 : i32
    %c0_i32_2 = arith.constant 0 : i32
    return %c0_i32, %c0_i32_0, %c0_i32_1 : i32, i32, i32
  }
  func.func @transform_2(%arg0: i32) -> (i32, i32) {
    %c0_i32 = arith.constant 0 : i32
    %c0_i32_0 = arith.constant 0 : i32
    %c0_i32_1 = arith.constant 0 : i32
    return %c0_i32, %c0_i32_0 : i32, i32
  }
  func.func @transform_3(%arg0: i32) -> (i32, i32) {
    %c0_i32 = arith.constant 0 : i32
    %c0_i32_0 = arith.constant 0 : i32
    %c0_i32_1 = arith.constant 0 : i32
    return %c0_i32, %c0_i32_0 : i32, i32
  }
  func.func @transform_4(%arg0: i32) -> (i32, i32, i32) {
    %c0_i32 = arith.constant 0 : i32
    %c0_i32_0 = arith.constant 0 : i32
    %c0_i32_1 = arith.constant 0 : i32
    return %arg0, %c0_i32, %c0_i32_0 : i32, i32, i32
  }
  func.func @transform_5(%arg0: i32) -> (i32, i32, i32) {
    %c0_i32 = arith.constant 0 : i32
    %c0_i32_0 = arith.constant 0 : i32
    %c0_i32_1 = arith.constant 0 : i32
    return %arg0, %c0_i32, %c0_i32_0 : i32, i32, i32
  }
}

</mosaic_0001>

<llo_original>
// kernel: basic_block1d.5
$region0: #{basic_block1d.5}
  #allocation0 [shape = 'u32[]', space=smem, size = 0x4, offset = 0x4, fixed_abs, tag = 'smem constant byte address 0x4 - core index']
  #allocation1 [shape = 'u32[144,128]{1,0:T(1,128)}', space=vmem, size = 0x12000, scoped, tag = 'internal scratch']
  %s0 = inlined_call_operand.vmem [shape: bf16[2,16,128], index: 0, kind: input, shape index: {}]
  %s1 = inlined_call_operand.vmem [shape: bf16[2,16,128], index: 1, kind: input, shape index: {}]
  %s2 = inlined_call_operand.vmem [shape: f32[1,128], index: 2, kind: input, shape index: {}]
  %s3 = inlined_call_operand.vmem [shape: f32[1,128], index: 3, kind: input, shape index: {}]
  %s4 = inlined_call_operand.vmem [shape: f32[2,16,128], index: 4, kind: output, shape index: {}]
  %s5 = sld [smem:[#allocation0]]
  $region49: #{basic_block1d.5} parent=0
    _
  %s7 = ssub.s32 1, %s5
  %s8 = scalar_select 0, %s7, %s5
  loop: start=0, step=1, limit=4
  $region2: #{basic_block1d.5} parent=0 // loop_pre_header
    _
  $region3: #{basic_block1d.5} parent=0 // loop_header
    %s10 = sphi 0, %s14
    %p11 = scmp.ge.s32.totalorder %s10, 4
    %s20 = sphi 0, %s22
    %s23 = sphi 0, %s20
    %s24 = sphi 0, %s23
    %s40 = sphi 0, %s24
    %s46 = sphi 0, %s48
    %s49 = sphi 0, %s46
    %s50 = sphi 0, %s49
    %s66 = sphi 0, %s50
    %s70 = sphi 0, %s70
    %s72 = sphi 0, %s70
    %s73 = sphi 0, %s72
    %s87 = sphi 0, %s73
    %s91 = sphi 0, %s91
    %s93 = sphi 0, %s91
    %s94 = sphi 0, %s93
    %s108 = sphi 0, %s94
    %s114 = sphi 0, %s116
    %s117 = sphi 0, %s114
    %s118 = sphi 0, %s117
    %s134 = sphi 0, %s118
  $region4: #{basic_block1d.5} parent=0 // loop_header_branch
    %13 = sbr.rel (%p11) target = $region8
  $region5: #{basic_block1d.5} parent=0 // loop_body
    %s15 = ssub.s32 %s10, 1
    %s16 = ssub.s32 %s10, 2
    %s17 = sadd.s32 %s10, 1
    %s18 = ssub.s32 %s10, %s17
    %p19 = scmp.eq.s32.totalorder %s18, 0
    %s21 = sadd.s32 %s20, 1
    %s22 = scalar_select %p19, %s20, %s21
    %p25 = pneg %p19
    %p26 = scmp.eq.s32.totalorder %s10, 1
    %p27 = por %p25, %p26
    %p28 = scmp.ne.s32.totalorder %s20, %s23
    %p29 = scmp.eq.s32.totalorder %s10, 0
    %p30 = por %p28, %p29
    %p31 = scmp.ne.s32.totalorder %s20, %s23
    %p32 = scmp.eq.s32.totalorder %s15, 1
    %p33 = por %p31, %p32
    %p34 = scmp.ne.s32.totalorder %s23, %s24
    %p35 = scmp.eq.s32.totalorder %s15, 0
    %p36 = por %p34, %p35
    %p37 = scmp.ne.s32.totalorder %s23, %s24
    %p38 = scmp.eq.s32.totalorder %s16, 1
    %p39 = por %p37, %p38
    %p41 = scmp.ne.s32.totalorder %s24, %s40
    %p42 = scmp.eq.s32.totalorder %s16, 0
    %p43 = por %p41, %p42
    %s44 = ssub.s32 %s10, %s17
    %p45 = scmp.eq.s32.totalorder %s44, 0
    %s47 = sadd.s32 %s46, 1
    %s48 = scalar_select %p45, %s46, %s47
    %p51 = pneg %p45
    %p52 = scmp.eq.s32.totalorder %s10, 1
    %p53 = por %p51, %p52
    %p54 = scmp.ne.s32.totalorder %s46, %s49
    %p55 = scmp.eq.s32.totalorder %s10, 0
    %p56 = por %p54, %p55
    %p57 = scmp.ne.s32.totalorder %s46, %s49
    %p58 = scmp.eq.s32.totalorder %s15, 1
    %p59 = por %p57, %p58
    %p60 = scmp.ne.s32.totalorder %s49, %s50
    %p61 = scmp.eq.s32.totalorder %s15, 0
    %p62 = por %p60, %p61
    %p63 = scmp.ne.s32.totalorder %s49, %s50
    %p64 = scmp.eq.s32.totalorder %s16, 1
    %p65 = por %p63, %p64
    %p67 = scmp.ne.s32.totalorder %s50, %s66
    %p68 = scmp.eq.s32.totalorder %s16, 0
    %p69 = por %p67, %p68
    %s71 = sadd.s32 %s70, 1
    %p74 = scmp.eq.s32.totalorder %s10, 1
    %p75 = scmp.ne.s32.totalorder %s70, %s72
    %p76 = scmp.eq.s32.totalorder %s10, 0
    %p77 = por %p75, %p76
    %p78 = scmp.ne.s32.totalorder %s70, %s72
    %p79 = scmp.eq.s32.totalorder %s15, 1
    %p80 = por %p78, %p79
    %p81 = scmp.ne.s32.totalorder %s72, %s73
    %p82 = scmp.eq.s32.totalorder %s15, 0
    %p83 = por %p81, %p82
    %p84 = scmp.ne.s32.totalorder %s72, %s73
    %p85 = scmp.eq.s32.totalorder %s16, 1
    %p86 = por %p84, %p85
    %p88 = scmp.ne.s32.totalorder %s73, %s87
    %p89 = scmp.eq.s32.totalorder %s16, 0
    %p90 = por %p88, %p89
    %s92 = sadd.s32 %s91, 1
    %p95 = scmp.eq.s32.totalorder %s10, 1
    %p96 = scmp.ne.s32.totalorder %s91, %s93
    %p97 = scmp.eq.s32.totalorder %s10, 0
    %p98 = por %p96, %p97
    %p99 = scmp.ne.s32.totalorder %s91, %s93
    %p100 = scmp.eq.s32.totalorder %s15, 1
    %p101 = por %p99, %p100
    %p102 = scmp.ne.s32.totalorder %s93, %s94
    %p103 = scmp.eq.s32.totalorder %s15, 0
    %p104 = por %p102, %p103
    %p105 = scmp.ne.s32.totalorder %s93, %s94
    %p106 = scmp.eq.s32.totalorder %s16, 1
    %p107 = por %p105, %p106
    %p109 = scmp.ne.s32.totalorder %s94, %s108
    %p110 = scmp.eq.s32.totalorder %s16, 0
    %p111 = por %p109, %p110
    %s112 = ssub.s32 %s10, %s17
    %p113 = scmp.eq.s32.totalorder %s112, 0
    %s115 = sadd.s32 %s114, 1
    %s116 = scalar_select %p113, %s114, %s115
    %p119 = pneg %p113
    %p120 = scmp.eq.s32.totalorder %s10, 1
    %p121 = por %p119, %p120
    %p122 = scmp.ne.s32.totalorder %s114, %s117
    %p123 = scmp.eq.s32.totalorder %s10, 0
    %p124 = por %p122, %p123
    %p125 = scmp.ne.s32.totalorder %s114, %s117
    %p126 = scmp.eq.s32.totalorder %s15, 1
    %p127 = por %p125, %p126
    %p128 = scmp.ne.s32.totalorder %s117, %s118
    %p129 = scmp.eq.s32.totalorder %s15, 0
    %p130 = por %p128, %p129
    %p131 = scmp.ne.s32.totalorder %s117, %s118
    %p132 = scmp.eq.s32.totalorder %s16, 1
    %p133 = por %p131, %p132
    %p135 = scmp.ne.s32.totalorder %s118, %s134
    %p136 = scmp.eq.s32.totalorder %s16, 0
    %p137 = por %p135, %p136
    %p138 = scmp.le.s32.totalorder 1, %s10
    %p139 = scmp.lt.s32.totalorder %s10, 3
    %p140 = pnand %p138, %p139
    %p141 = pneg %p140
    // Predicated region
    $region9: #{basic_block1d.5} parent=5 // pred_check
      _
    $region10: #{basic_block1d.5} parent=5 // pred_check_branch
      %143 = sbr.rel (%p140) target = $region12
    $region11: #{basic_block1d.5} parent=5 // pred_region
      %s144 = ssub.s32 %s10, 1
      // Predicated region
      $region13: #{basic_block1d.5} parent=11 // pred_check
        %p145 = pneg %p83
      $region14: #{basic_block1d.5} parent=11 // pred_check_branch
        %147 = sbr.rel (%p145) target = $region16
      $region15: #{basic_block1d.5} parent=11 // pred_region
        _
      $region16: #{basic_block1d.5} parent=11 // pred_fallthru
        _
      // Predicated region
      $region17: #{basic_block1d.5} parent=11 // pred_check
        %p148 = pneg %p104
      $region18: #{basic_block1d.5} parent=11 // pred_check_branch
        %150 = sbr.rel (%p148) target = $region20
      $region19: #{basic_block1d.5} parent=11 // pred_region
        _
      $region20: #{basic_block1d.5} parent=11 // pred_fallthru
        _
    $region12: #{basic_block1d.5} parent=5 // pred_fallthru
      _
    %p151 = scmp.lt.s32.totalorder %s10, 2
    // Predicated region
    $region21: #{basic_block1d.5} parent=5 // pred_check
      %p152 = pneg %p151
    $region22: #{basic_block1d.5} parent=5 // pred_check_branch
      %154 = sbr.rel (%p152) target = $region24
    $region23: #{basic_block1d.5} parent=5 // pred_region
      // Predicated region
      $region25: #{basic_block1d.5} parent=23 // pred_check
        %p155 = pneg %p30
      $region26: #{basic_block1d.5} parent=23 // pred_check_branch
        %157 = sbr.rel (%p155) target = $region28
      $region27: #{basic_block1d.5} parent=23 // pred_region
        %p158 = scmp.lt.s32.totalorder %s10, 1
        %s159 = scalar_select %p158, %s10, 1
        %s160 = smul.addr %s159, 2
        %s161 = smul.addr %s160, 4
        %s162 = scalar_lea.vmem %s0, %s161
      $region28: #{basic_block1d.5} parent=23 // pred_fallthru
        _
      // Predicated region
      $region29: #{basic_block1d.5} parent=23 // pred_check
        %p163 = pneg %p56
      $region30: #{basic_block1d.5} parent=23 // pred_check_branch
        %165 = sbr.rel (%p163) target = $region32
      $region31: #{basic_block1d.5} parent=23 // pred_region
        %p166 = scmp.lt.s32.totalorder %s10, 1
        %s167 = scalar_select %p166, %s10, 1
        %s168 = smul.addr %s167, 2
        %s169 = smul.addr %s168, 4
        %s170 = scalar_lea.vmem %s1, %s169
      $region32: #{basic_block1d.5} parent=23 // pred_fallthru
        _
    $region24: #{basic_block1d.5} parent=5 // pred_fallthru
      _
    %p171 = scmp.le.s32.totalorder 1, %s10
    %p172 = scmp.lt.s32.totalorder %s10, 3
    %p173 = pnand %p171, %p172
    %p174 = pneg %p173
    // Predicated region
    $region33: #{basic_block1d.5} parent=5 // pred_check
      _
    $region34: #{basic_block1d.5} parent=5 // pred_check_branch
      %176 = sbr.rel (%p173) target = $region36
    $region35: #{basic_block1d.5} parent=5 // pred_region
      %s177 = ssub.s32 %s10, 1
      %p178 = scmp.lt.s32.totalorder %s15, 1
      %s179 = scalar_select %p178, %s15, 1
      %s180 = smul.addr %s179, 2
      %s181 = smul.addr %s180, 4
      %s182 = scalar_lea.vmem %s0, %s181
      %p183 = pneg %p36
      %p184 = pneg %p33
      %p185 = scmp.lt.s32.totalorder %s15, 1
      %s186 = scalar_select %p185, %s15, 1
      %s187 = smul.addr %s186, 2
      %s188 = smul.addr %s187, 4
      %s189 = scalar_lea.vmem %s1, %s188
      %p190 = pneg %p62
      %p191 = pneg %p59
      %p192 = pneg %p83
      %p193 = pneg %p80
      %p194 = pneg %p104
      %p195 = pneg %p101
      %p196 = pneg %p130
      %p197 = pneg %p127
      %p198 = scmp.lt.s32.totalorder %s15, 1
      %s199 = scalar_select %p198, %s15, 1
      %s200 = smul.addr %s199, 2
      %s201 = smul.addr %s200, 8
      %s202 = scalar_lea.vmem %s4, %s201
      %p203 = scmp.lt.s32.totalorder %s15, 1
      %s204 = scalar_select %p203, %s15, 1
      %s205 = smul.addr %s204, 2
      %s206 = smul.addr %s205, 4
      %s207 = scalar_lea.vmem %s0, %s206
      %p208 = scmp.lt.s32.totalorder %s15, 1
      %s209 = scalar_select %p208, %s15, 1
      %s210 = smul.addr %s209, 2
      %s211 = smul.addr %s210, 4
      %s212 = scalar_lea.vmem %s1, %s211
      %p213 = scmp.lt.s32.totalorder %s15, 1
      %s214 = scalar_select %p213, %s15, 1
      %s215 = smul.addr %s214, 2
      %s216 = smul.addr %s215, 8
      %s217 = scalar_lea.vmem %s4, %s216
      %v218 = vld [vmem:[%s207] sm:$0xf]
      %v219 = vld [vmem:[%s207 + $0x4] sm:$0xf]
      %v220 = vunpack.c.l.bf16 %v218
      %v221 = vunpack.c.l.bf16 %v219
      %v222 = vld [vmem:[%s212] sm:$0xf]
      %v223 = vld [vmem:[%s212 + $0x4] sm:$0xf]
      %v224 = vunpack.c.l.bf16 %v222
      %v225 = vunpack.c.l.bf16 %v223
      %v226 = vld [vmem:[%s2] sm:$0x1]
      %v228 = vlaneseq
      %v229 = vshrl.u32 %v228, 7
      %v230 = vsub.s32 0, %v229
      %v231 = vrot.slane %v226, %v230
      %v233 = vmul.f32 %v220, %v231
      %v234 = vmul.f32 %v221, %v231
      %v235 = vld [vmem:[%s3] sm:$0x1]
      %v237 = vlaneseq
      %v238 = vshrl.u32 %v237, 7
      %v239 = vsub.s32 0, %v238
      %v240 = vrot.slane %v235, %v239
      %v242 = vadd.f32 %v233, %v240
      %v243 = vadd.f32 %v234, %v240
      %v244 = vadd.f32 %v242, %v224
      %v245 = vadd.f32 %v243, %v225
      %v246 = vmax.f32 %v244, 0.0
      %v247 = vmax.f32 %v245, 0.0
      %248 = vst [vmem:[%s217] sm:$0xff] %v246
      %249 = vst [vmem:[%s217 + $0x8] sm:$0xff] %v247
      %p250 = scmp.lt.s32.totalorder %s15, 1
      %s251 = scalar_select %p250, %s15, 1
      %s252 = smul.addr %s251, 2
      %s253 = smul.addr %s252, 8
      %s254 = scalar_lea.vmem %s4, %s253
      // Predicated region
      $region37: #{basic_block1d.5} parent=35 // pred_check
        %p255 = pneg %p127
      $region38: #{basic_block1d.5} parent=35 // pred_check_branch
        %257 = sbr.rel (%p255) target = $region40
      $region39: #{basic_block1d.5} parent=35 // pred_region
        _
      $region40: #{basic_block1d.5} parent=35 // pred_fallthru
        _
    $region36: #{basic_block1d.5} parent=5 // pred_fallthru
      _
    %p258 = scmp.le.s32.totalorder 2, %s10
    // Predicated region
    $region41: #{basic_block1d.5} parent=5 // pred_check
      %p259 = pneg %p258
    $region42: #{basic_block1d.5} parent=5 // pred_check_branch
      %261 = sbr.rel (%p259) target = $region44
    $region43: #{basic_block1d.5} parent=5 // pred_region
      %s262 = ssub.s32 %s10, 2
      // Predicated region
      $region45: #{basic_block1d.5} parent=43 // pred_check
        %p263 = pneg %p133
      $region46: #{basic_block1d.5} parent=43 // pred_check_branch
        %265 = sbr.rel (%p263) target = $region48
      $region47: #{basic_block1d.5} parent=43 // pred_region
        %p266 = scmp.lt.s32.totalorder %s16, 1
        %s267 = scalar_select %p266, %s16, 1
        %s268 = smul.addr %s267, 2
        %s269 = smul.addr %s268, 8
        %s270 = scalar_lea.vmem %s4, %s269
      $region48: #{basic_block1d.5} parent=43 // pred_fallthru
        _
    $region44: #{basic_block1d.5} parent=5 // pred_fallthru
      _
  $region6: #{basic_block1d.5} parent=0 // loop_footer
    %s14 = sadd.s32 1, %s10
  $region7: #{basic_block1d.5} parent=0 // loop_footer_branch
    %9 = sbr.rel target = $region3
  $region8: #{basic_block1d.5} parent=0 // loop_exit
    _

// kernel: basic_block1d.3
$region0: #{basic_block1d.3}
  #allocation0 [shape = 'u32[]', space=smem, size = 0x4, offset = 0x4, fixed_abs, tag = 'smem constant byte address 0x4 - core index']
  #allocation1 [shape = 'u32[144,128]{1,0:T(1,128)}', space=vmem, size = 0x12000, scoped, tag = 'internal scratch']
  #allocation2 [shape = 'bf16[40,128]{1,0:T(8,128)(2,1)}', space=vmem, size = 0x2800, scoped, tag = 'scratch operand']
  %s0 = inlined_call_operand.vmem [shape: bf16[2,16,128], index: 0, kind: input, shape index: {}]
  %s1 = inlined_call_operand.vmem [shape: bf16[3,128,128], index: 1, kind: input, shape index: {}]
  %s2 = inlined_call_operand.vmem [shape: f32[1,128], index: 2, kind: input, shape index: {}, may-alias: {2,3}]
  %s3 = inlined_call_operand.vmem [shape: f32[1,128], index: 3, kind: input, shape index: {}, may-alias: {2,3}]
  %s4 = inlined_call_operand.vmem [shape: bf16[2,16,128], index: 4, kind: output, shape index: {0}]
  %s5 = inlined_call_operand.vmem [shape: f32[2,2,128], index: 5, kind: output, shape index: {1}]
  %6 = xla_tuple %s4, %s5
  %s7 = sld [smem:[#allocation0]]
  $region57: #{basic_block1d.3} parent=0
    _
  %s9 = ssub.s32 1, %s7
  %s10 = scalar_select 0, %s9, %s7
  loop: start=0, step=1, limit=4
  $region2: #{basic_block1d.3} parent=0 // loop_pre_header
    _
  $region3: #{basic_block1d.3} parent=0 // loop_header
    %s12 = sphi 0, %s16
    %p13 = scmp.ge.s32.totalorder %s12, 4
    %s22 = sphi 0, %s24
    %s25 = sphi 0, %s22
    %s26 = sphi 0, %s25
    %s42 = sphi 0, %s26
    %s46 = sphi 0, %s46
    %s48 = sphi 0, %s46
    %s49 = sphi 0, %s48
    %s63 = sphi 0, %s49
    %s67 = sphi 0, %s67
    %s69 = sphi 0, %s67
    %s70 = sphi 0, %s69
    %s84 = sphi 0, %s70
    %s88 = sphi 0, %s88
    %s90 = sphi 0, %s88
    %s91 = sphi 0, %s90
    %s105 = sphi 0, %s91
    %s111 = sphi 0, %s113
    %s114 = sphi 0, %s111
    %s115 = sphi 0, %s114
    %s131 = sphi 0, %s115
    %s137 = sphi 0, %s139
    %s140 = sphi 0, %s137
    %s141 = sphi 0, %s140
    %s157 = sphi 0, %s141
  $region4: #{basic_block1d.3} parent=0 // loop_header_branch
    %15 = sbr.rel (%p13) target = $region8
  $region5: #{basic_block1d.3} parent=0 // loop_body
    %s17 = ssub.s32 %s12, 1
    %s18 = ssub.s32 %s12, 2
    %s19 = sadd.s32 %s12, 1
    %s20 = ssub.s32 %s12, %s19
    %p21 = scmp.eq.s32.totalorder %s20, 0
    %s23 = sadd.s32 %s22, 1
    %s24 = scalar_select %p21, %s22, %s23
    %p27 = pneg %p21
    %p28 = scmp.eq.s32.totalorder %s12, 1
    %p29 = por %p27, %p28
    %p30 = scmp.ne.s32.totalorder %s22, %s25
    %p31 = scmp.eq.s32.totalorder %s12, 0
    %p32 = por %p30, %p31
    %p33 = scmp.ne.s32.totalorder %s22, %s25
    %p34 = scmp.eq.s32.totalorder %s17, 1
    %p35 = por %p33, %p34
    %p36 = scmp.ne.s32.totalorder %s25, %s26
    %p37 = scmp.eq.s32.totalorder %s17, 0
    %p38 = por %p36, %p37
    %p39 = scmp.ne.s32.totalorder %s25, %s26
    %p40 = scmp.eq.s32.totalorder %s18, 1
    %p41 = por %p39, %p40
    %p43 = scmp.ne.s32.totalorder %s26, %s42
    %p44 = scmp.eq.s32.totalorder %s18, 0
    %p45 = por %p43, %p44
    %s47 = sadd.s32 %s46, 1
    %p50 = scmp.eq.s32.totalorder %s12, 1
    %p51 = scmp.ne.s32.totalorder %s46, %s48
    %p52 = scmp.eq.s32.totalorder %s12, 0
    %p53 = por %p51, %p52
    %p54 = scmp.ne.s32.totalorder %s46, %s48
    %p55 = scmp.eq.s32.totalorder %s17, 1
    %p56 = por %p54, %p55
    %p57 = scmp.ne.s32.totalorder %s48, %s49
    %p58 = scmp.eq.s32.totalorder %s17, 0
    %p59 = por %p57, %p58
    %p60 = scmp.ne.s32.totalorder %s48, %s49
    %p61 = scmp.eq.s32.totalorder %s18, 1
    %p62 = por %p60, %p61
    %p64 = scmp.ne.s32.totalorder %s49, %s63
    %p65 = scmp.eq.s32.totalorder %s18, 0
    %p66 = por %p64, %p65
    %s68 = sadd.s32 %s67, 1
    %p71 = scmp.eq.s32.totalorder %s12, 1
    %p72 = scmp.ne.s32.totalorder %s67, %s69
    %p73 = scmp.eq.s32.totalorder %s12, 0
    %p74 = por %p72, %p73
    %p75 = scmp.ne.s32.totalorder %s67, %s69
    %p76 = scmp.eq.s32.totalorder %s17, 1
    %p77 = por %p75, %p76
    %p78 = scmp.ne.s32.totalorder %s69, %s70
    %p79 = scmp.eq.s32.totalorder %s17, 0
    %p80 = por %p78, %p79
    %p81 = scmp.ne.s32.totalorder %s69, %s70
    %p82 = scmp.eq.s32.totalorder %s18, 1
    %p83 = por %p81, %p82
    %p85 = scmp.ne.s32.totalorder %s70, %s84
    %p86 = scmp.eq.s32.totalorder %s18, 0
    %p87 = por %p85, %p86
    %s89 = sadd.s32 %s88, 1
    %p92 = scmp.eq.s32.totalorder %s12, 1
    %p93 = scmp.ne.s32.totalorder %s88, %s90
    %p94 = scmp.eq.s32.totalorder %s12, 0
    %p95 = por %p93, %p94
    %p96 = scmp.ne.s32.totalorder %s88, %s90
    %p97 = scmp.eq.s32.totalorder %s17, 1
    %p98 = por %p96, %p97
    %p99 = scmp.ne.s32.totalorder %s90, %s91
    %p100 = scmp.eq.s32.totalorder %s17, 0
    %p101 = por %p99, %p100
    %p102 = scmp.ne.s32.totalorder %s90, %s91
    %p103 = scmp.eq.s32.totalorder %s18, 1
    %p104 = por %p102, %p103
    %p106 = scmp.ne.s32.totalorder %s91, %s105
    %p107 = scmp.eq.s32.totalorder %s18, 0
    %p108 = por %p106, %p107
    %s109 = ssub.s32 %s12, %s19
    %p110 = scmp.eq.s32.totalorder %s109, 0
    %s112 = sadd.s32 %s111, 1
    %s113 = scalar_select %p110, %s111, %s112
    %p116 = pneg %p110
    %p117 = scmp.eq.s32.totalorder %s12, 1
    %p118 = por %p116, %p117
    %p119 = scmp.ne.s32.totalorder %s111, %s114
    %p120 = scmp.eq.s32.totalorder %s12, 0
    %p121 = por %p119, %p120
    %p122 = scmp.ne.s32.totalorder %s111, %s114
    %p123 = scmp.eq.s32.totalorder %s17, 1
    %p124 = por %p122, %p123
    %p125 = scmp.ne.s32.totalorder %s114, %s115
    %p126 = scmp.eq.s32.totalorder %s17, 0
    %p127 = por %p125, %p126
    %p128 = scmp.ne.s32.totalorder %s114, %s115
    %p129 = scmp.eq.s32.totalorder %s18, 1
    %p130 = por %p128, %p129
    %p132 = scmp.ne.s32.totalorder %s115, %s131
    %p133 = scmp.eq.s32.totalorder %s18, 0
    %p134 = por %p132, %p133
    %s135 = ssub.s32 %s12, %s19
    %p136 = scmp.eq.s32.totalorder %s135, 0
    %s138 = sadd.s32 %s137, 1
    %s139 = scalar_select %p136, %s137, %s138
    %p142 = pneg %p136
    %p143 = scmp.eq.s32.totalorder %s12, 1
    %p144 = por %p142, %p143
    %p145 = scmp.ne.s32.totalorder %s137, %s140
    %p146 = scmp.eq.s32.totalorder %s12, 0
    %p147 = por %p145, %p146
    %p148 = scmp.ne.s32.totalorder %s137, %s140
    %p149 = scmp.eq.s32.totalorder %s17, 1
    %p150 = por %p148, %p149
    %p151 = scmp.ne.s32.totalorder %s140, %s141
    %p152 = scmp.eq.s32.totalorder %s17, 0
    %p153 = por %p151, %p152
    %p154 = scmp.ne.s32.totalorder %s140, %s141
    %p155 = scmp.eq.s32.totalorder %s18, 1
    %p156 = por %p154, %p155
    %p158 = scmp.ne.s32.totalorder %s141, %s157
    %p159 = scmp.eq.s32.totalorder %s18, 0
    %p160 = por %p158, %p159
    %p161 = scmp.le.s32.totalorder 1, %s12
    %p162 = scmp.lt.s32.totalorder %s12, 3
    %p163 = pnand %p161, %p162
    %p164 = pneg %p163
    // Predicated region
    $region9: #{basic_block1d.3} parent=5 // pred_check
      _
    $region10: #{basic_block1d.3} parent=5 // pred_check_branch
      %166 = sbr.rel (%p163) target = $region12
    $region11: #{basic_block1d.3} parent=5 // pred_region
      %s167 = ssub.s32 %s12, 1
      // Predicated region
      $region13: #{basic_block1d.3} parent=11 // pred_check
        %p168 = pneg %p59
      $region14: #{basic_block1d.3} parent=11 // pred_check_branch
        %170 = sbr.rel (%p168) target = $region16
      $region15: #{basic_block1d.3} parent=11 // pred_region
        _
      $region16: #{basic_block1d.3} parent=11 // pred_fallthru
        _
      // Predicated region
      $region17: #{basic_block1d.3} parent=11 // pred_check
        %p171 = pneg %p80
      $region18: #{basic_block1d.3} parent=11 // pred_check_branch
        %173 = sbr.rel (%p171) target = $region20
      $region19: #{basic_block1d.3} parent=11 // pred_region
        _
      $region20: #{basic_block1d.3} parent=11 // pred_fallthru
        _
      // Predicated region
      $region21: #{basic_block1d.3} parent=11 // pred_check
        %p174 = pneg %p101
      $region22: #{basic_block1d.3} parent=11 // pred_check_branch
        %176 = sbr.rel (%p174) target = $region24
      $region23: #{basic_block1d.3} parent=11 // pred_region
        _
      $region24: #{basic_block1d.3} parent=11 // pred_fallthru
        _
    $region12: #{basic_block1d.3} parent=5 // pred_fallthru
      _
    %p177 = scmp.lt.s32.totalorder %s12, 2
    // Predicated region
    $region25: #{basic_block1d.3} parent=5 // pred_check
      %p178 = pneg %p177
    $region26: #{basic_block1d.3} parent=5 // pred_check_branch
      %180 = sbr.rel (%p178) target = $region28
    $region27: #{basic_block1d.3} parent=5 // pred_region
      // Predicated region
      $region29: #{basic_block1d.3} parent=27 // pred_check
        %p181 = pneg %p32
      $region30: #{basic_block1d.3} parent=27 // pred_check_branch
        %183 = sbr.rel (%p181) target = $region32
      $region31: #{basic_block1d.3} parent=27 // pred_region
        %p184 = scmp.lt.s32.totalorder %s12, 1
        %s185 = scalar_select %p184, %s12, 1
        %s186 = smul.addr %s185, 2
        %s187 = smul.addr %s186, 4
        %s188 = scalar_lea.vmem %s0, %s187
      $region32: #{basic_block1d.3} parent=27 // pred_fallthru
        _
    $region28: #{basic_block1d.3} parent=5 // pred_fallthru
      _
    %p189 = scmp.le.s32.totalorder 1, %s12
    %p190 = scmp.lt.s32.totalorder %s12, 3
    %p191 = pnand %p189, %p190
    %p192 = pneg %p191
    // Predicated region
    $region33: #{basic_block1d.3} parent=5 // pred_check
      _
    $region34: #{basic_block1d.3} parent=5 // pred_check_branch
      %194 = sbr.rel (%p191) target = $region36
    $region35: #{basic_block1d.3} parent=5 // pred_region
      %s195 = ssub.s32 %s12, 1
      %p196 = scmp.lt.s32.totalorder %s17, 1
      %s197 = scalar_select %p196, %s17, 1
      %s198 = smul.addr %s197, 2
      %s199 = smul.addr %s198, 4
      %s200 = scalar_lea.vmem %s0, %s199
      %p201 = pneg %p38
      %p202 = pneg %p35
      %p203 = pneg %p59
      %p204 = pneg %p56
      %p205 = pneg %p80
      %p206 = pneg %p77
      %p207 = pneg %p101
      %p208 = pneg %p98
      %p209 = pneg %p127
      %p210 = pneg %p124
      %p211 = scmp.lt.s32.totalorder %s17, 1
      %s212 = scalar_select %p211, %s17, 1
      %s213 = smul.addr %s212, 2
      %s214 = smul.addr %s213, 4
      %s215 = scalar_lea.vmem %s4, %s214
      %p216 = pneg %p153
      %p217 = pneg %p150
      %p218 = scmp.lt.s32.totalorder %s17, 1
      %s219 = scalar_select %p218, %s17, 1
      %s220 = smul.addr %s219, 2
      %s221 = scalar_lea.vmem %s5, %s220
      %p222 = scmp.lt.s32.totalorder %s17, 1
      %s223 = scalar_select %p222, %s17, 1
      %s224 = smul.addr %s223, 2
      %s225 = smul.addr %s224, 4
      %s226 = scalar_lea.vmem %s0, %s225
      %p227 = scmp.lt.s32.totalorder %s17, 1
      %s228 = scalar_select %p227, %s17, 1
      %s229 = smul.addr %s228, 2
      %s230 = smul.addr %s229, 4
      %s231 = scalar_lea.vmem %s4, %s230
      %p232 = scmp.lt.s32.totalorder %s17, 1
      %s233 = scalar_select %p232, %s17, 1
      %s234 = smul.addr %s233, 2
      %s235 = scalar_lea.vmem %s5, %s234
      %vm237 = vcmask 1043459
      %vm238 = vsmask.f32 7950
      %vm239 = vmand %vm237, %vm238
      %v240 = vld [vmem:[#allocation2] sm:$0x8]
      %v241 = vsel %vm239, 0, %v240
      %242 = vst [vmem:[#allocation2] sm:$0x8] %v241
      %243 = vst [vmem:[#allocation2 + $0x10] sm:$0xf] 0
      %v244 = vld [vmem:[%s226] sm:$0xf]
      %v245 = vld [vmem:[%s226 + $0x4] sm:$0xf]
      %246 = vst [vmem:[#allocation2 + $0x4] sm:$0xf] %v244
      %247 = vst [vmem:[#allocation2 + $0x8] sm:$0xf] %v245
      %248 = vst [vmem:[#allocation2 + $0xc] sm:$0xf] 0
      %v249 = vld [vmem:[#allocation2] sm:$0x8]
      %v250 = vld [vmem:[#allocation2 + $0x4] sm:$0xf]
      %v251 = vld [vmem:[#allocation2 + $0x8] sm:$0xf]
      %v252 = vld [vmem:[#allocation2 + $0xc] sm:$0xf]
      %v253 = vld [vmem:[%s1] sm:$0xf]
      %v254 = vld [vmem:[%s1 + $0x4] sm:$0xf]
      %v255 = vld [vmem:[%s1 + $0x8] sm:$0xf]
      %v256 = vld [vmem:[%s1 + $0xc] sm:$0xf]
      %v257 = vld [vmem:[%s1 + $0x10] sm:$0xf]
      %v258 = vld [vmem:[%s1 + $0x14] sm:$0xf]
      %v259 = vld [vmem:[%s1 + $0x18] sm:$0xf]
      %v260 = vld [vmem:[%s1 + $0x1c] sm:$0xf]
      %v261 = vld [vmem:[%s1 + $0x20] sm:$0xf]
      %v262 = vld [vmem:[%s1 + $0x24] sm:$0xf]
      %v263 = vld [vmem:[%s1 + $0x28] sm:$0xf]
      %v264 = vld [vmem:[%s1 + $0x2c] sm:$0xf]
      %v265 = vld [vmem:[%s1 + $0x30] sm:$0xf]
      %v266 = vld [vmem:[%s1 + $0x34] sm:$0xf]
      %v267 = vld [vmem:[%s1 + $0x38] sm:$0xf]
      %v268 = vld [vmem:[%s1 + $0x3c] sm:$0xf]
      %s269 = scalar_lea.vmem %s1, 64
      %v270 = vld [vmem:[%s269] sm:$0xf]
      %v271 = vld [vmem:[%s269 + $0x4] sm:$0xf]
      %v272 = vld [vmem:[%s269 + $0x8] sm:$0xf]
      %v273 = vld [vmem:[%s269 + $0xc] sm:$0xf]
      %v274 = vld [vmem:[%s269 + $0x10] sm:$0xf]
      %v275 = vld [vmem:[%s269 + $0x14] sm:$0xf]
      %v276 = vld [vmem:[%s269 + $0x18] sm:$0xf]
      %v277 = vld [vmem:[%s269 + $0x1c] sm:$0xf]
      %v278 = vld [vmem:[%s269 + $0x20] sm:$0xf]
      %v279 = vld [vmem:[%s269 + $0x24] sm:$0xf]
      %v280 = vld [vmem:[%s269 + $0x28] sm:$0xf]
      %v281 = vld [vmem:[%s269 + $0x2c] sm:$0xf]
      %v282 = vld [vmem:[%s269 + $0x30] sm:$0xf]
      %v283 = vld [vmem:[%s269 + $0x34] sm:$0xf]
      %v284 = vld [vmem:[%s269 + $0x38] sm:$0xf]
      %v285 = vld [vmem:[%s269 + $0x3c] sm:$0xf]
      %v289 = vunpack.c.l.b16 %v250
      %v290 = vunpack.c.l.b16 %v251
      %v291 = vunpack.c.l.b16 %v252
      %v292 = vpack.c.b16 %v290, %v289
      %v293 = vpack.c.b16 %v291, %v291
      %v312 = vunpack.c.l.b16 %v270
      %v313 = vunpack.c.l.b16 %v271
      %v314 = vunpack.c.l.b16 %v272
      %v315 = vunpack.c.l.b16 %v273
      %v316 = vunpack.c.l.b16 %v274
      %v317 = vunpack.c.l.b16 %v275
      %v318 = vunpack.c.l.b16 %v276
      %v319 = vunpack.c.l.b16 %v277
      %v320 = vunpack.c.l.b16 %v278
      %v321 = vunpack.c.l.b16 %v279
      %v322 = vunpack.c.l.b16 %v280
      %v323 = vunpack.c.l.b16 %v281
      %v324 = vunpack.c.l.b16 %v282
      %v325 = vunpack.c.l.b16 %v283
      %v326 = vunpack.c.l.b16 %v284
      %v327 = vunpack.c.l.b16 %v285
      %v328 = vpack.c.b16 %v313, %v312
      %v329 = vpack.c.b16 %v315, %v314
      %v330 = vpack.c.b16 %v317, %v316
      %v331 = vpack.c.b16 %v319, %v318
      %v332 = vpack.c.b16 %v321, %v320
      %v333 = vpack.c.b16 %v323, %v322
      %v334 = vpack.c.b16 %v325, %v324
      %v335 = vpack.c.b16 %v327, %v326
      %344 = vmatprep.subr.bf16.mxu0 0
      %345 = vmatpush1.bf16.msra.mxu0 %v328
      %346 = vmatprep.subr.bf16.mxu0 0
      %347 = vmatpush1.bf16.msra.mxu0 %v329
      %348 = vmatprep.subr.bf16.mxu0 0
      %349 = vmatpush1.bf16.msra.mxu0 %v330
      %350 = vmatprep.subr.bf16.mxu0 0
      %351 = vmatpush1.bf16.msra.mxu0 %v331
      %352 = vmatprep.subr.bf16.mxu0 0
      %353 = vmatpush1.bf16.msra.mxu0 %v332
      %354 = vmatprep.subr.bf16.mxu0 0
      %355 = vmatpush1.bf16.msra.mxu0 %v333
      %356 = vmatprep.subr.bf16.mxu0 0
      %357 = vmatpush1.bf16.msra.mxu0 %v334
      %358 = vmatprep.subr.bf16.mxu0 0
      %359 = vmatpush1.bf16.msra.mxu0 %v335
      %360 = vmatprep.subr.bf16.mxu0 0
      %361 = vmatpush1.bf16.msra.mxu0 0
      %362 = vmatprep.subr.bf16.mxu0 0
      %363 = vmatpush1.bf16.msra.mxu0 0
      %364 = vmatprep.subr.bf16.mxu0 0
      %365 = vmatpush1.bf16.msra.mxu0 0
      %366 = vmatprep.subr.bf16.mxu0 0
      %367 = vmatpush1.bf16.msra.mxu0 0
      %368 = vmatprep.subr.bf16.mxu0 0
      %369 = vmatpush1.bf16.msra.mxu0 0
      %370 = vmatprep.subr.bf16.mxu0 0
      %371 = vmatpush1.bf16.msra.mxu0 0
      %372 = vmatprep.subr.bf16.mxu0 0
      %373 = vmatpush1.bf16.msra.mxu0 0
      %374 = vmatprep.subr.bf16.mxu0 0
      %375 = vmatpush1.bf16.msra.mxu0 0
      %376 = vmatprep.mubr.bf16.mxu0 0
      %377 = vmatmul.mubr.bf16.gmra.mrb[0].mxu0 %v292
      %v378 = vpop.f32.mrb[0].mxu0
      %v379 = vadd.f32 0.0, %v378
      %v380 = vpop.f32.mrb[0].mxu0
      %v381 = vpop.f32.mrb[0].mxu0
      %v382 = vadd.f32 0.0, %v381
      %v383 = vpop.f32.mrb[0].mxu0
      %384 = vmatprep.mubr.bf16.mxu0 0
      %385 = vmatmul.mubr.bf16.gmra.mrb[0].mxu0 %v293
      %v386 = vpop.f32.mrb[0].mxu0
      %v387 = vpop.f32.mrb[0].mxu0
      %v388 = vpop.f32.mrb[0].mxu0
      %v389 = vpop.f32.mrb[0].mxu0
      %390 = vdwg.mxu0
      %v392 = vunpack.c.l.b16 %v249
      %v393 = vpack.c.b16 %v289, %v392
      %v394 = vpack.c.b16 %v291, %v290
      %vm395 = vsmask.f32 4352
      %v397 = vshrl.u32 %v393, 16
      %v399 = vrot.slane %v397, 3
      %v400 = vshll.u32 %v393, 16
      %v402 = vrot.slane %v400, 4
      %v403 = vor.u32 %v399, %v402
      %v405 = vshrl.u32 %v394, 16
      %v407 = vrot.slane %v405, 3
      %v408 = vshll.u32 %v394, 16
      %v410 = vrot.slane %v408, 4
      %v411 = vor.u32 %v407, %v410
      %v412 = vsel %vm395, %v403, %v411
      %v431 = vunpack.c.l.b16 %v253
      %v432 = vunpack.c.l.b16 %v254
      %v433 = vunpack.c.l.b16 %v255
      %v434 = vunpack.c.l.b16 %v256
      %v435 = vunpack.c.l.b16 %v257
      %v436 = vunpack.c.l.b16 %v258
      %v437 = vunpack.c.l.b16 %v259
      %v438 = vunpack.c.l.b16 %v260
      %v439 = vunpack.c.l.b16 %v261
      %v440 = vunpack.c.l.b16 %v262
      %v441 = vunpack.c.l.b16 %v263
      %v442 = vunpack.c.l.b16 %v264
      %v443 = vunpack.c.l.b16 %v265
      %v444 = vunpack.c.l.b16 %v266
      %v445 = vunpack.c.l.b16 %v267
      %v446 = vunpack.c.l.b16 %v268
      %v447 = vpack.c.b16 %v432, %v431
      %v448 = vpack.c.b16 %v434, %v433
      %v449 = vpack.c.b16 %v436, %v435
      %v450 = vpack.c.b16 %v438, %v437
      %v451 = vpack.c.b16 %v440, %v439
      %v452 = vpack.c.b16 %v442, %v441
      %v453 = vpack.c.b16 %v444, %v443
      %v454 = vpack.c.b16 %v446, %v445
      %463 = vmatprep.subr.bf16.mxu0 0
      %464 = vmatpush1.bf16.msra.mxu0 %v447
      %465 = vmatprep.subr.bf16.mxu0 0
      %466 = vmatpush1.bf16.msra.mxu0 %v448
      %467 = vmatprep.subr.bf16.mxu0 0
      %468 = vmatpush1.bf16.msra.mxu0 %v449
      %469 = vmatprep.subr.bf16.mxu0 0
      %470 = vmatpush1.bf16.msra.mxu0 %v450
      %471 = vmatprep.subr.bf16.mxu0 0
      %472 = vmatpush1.bf16.msra.mxu0 %v451
      %473 = vmatprep.subr.bf16.mxu0 0
      %474 = vmatpush1.bf16.msra.mxu0 %v452
      %475 = vmatprep.subr.bf16.mxu0 0
      %476 = vmatpush1.bf16.msra.mxu0 %v453
      %477 = vmatprep.subr.bf16.mxu0 0
      %478 = vmatpush1.bf16.msra.mxu0 %v454
      %479 = vmatprep.subr.bf16.mxu0 0
      %480 = vmatpush1.bf16.msra.mxu0 0
      %481 = vmatprep.subr.bf16.mxu0 0
      %482 = vmatpush1.bf16.msra.mxu0 0
      %483 = vmatprep.subr.bf16.mxu0 0
      %484 = vmatpush1.bf16.msra.mxu0 0
      %485 = vmatprep.subr.bf16.mxu0 0
      %486 = vmatpush1.bf16.msra.mxu0 0
      %487 = vmatprep.subr.bf16.mxu0 0
      %488 = vmatpush1.bf16.msra.mxu0 0
      %489 = vmatprep.subr.bf16.mxu0 0
      %490 = vmatpush1.bf16.msra.mxu0 0
      %491 = vmatprep.subr.bf16.mxu0 0
      %492 = vmatpush1.bf16.msra.mxu0 0
      %493 = vmatprep.subr.bf16.mxu0 0
      %494 = vmatpush1.bf16.msra.mxu0 0
      %495 = vmatprep.mubr.bf16.mxu0 0
      %496 = vmatmul.mubr.bf16.gmra.mrb[0].mxu0 %v412
      %v497 = vpop.f32.mrb[0].mxu0
      %v498 = vadd.f32 %v379, %v497
      %v499 = vpop.f32.mrb[0].mxu0
      %v500 = vpop.f32.mrb[0].mxu0
      %v501 = vadd.f32 %v382, %v500
      %v502 = vpop.f32.mrb[0].mxu0
      %503 = vmatprep.mubr.bf16.mxu0 0
      %504 = vmatmul.mubr.bf16.gmra.mrb[0].mxu0 %v411
      %v505 = vpop.f32.mrb[0].mxu0
      %v506 = vpop.f32.mrb[0].mxu0
      %v507 = vpop.f32.mrb[0].mxu0
      %v508 = vpop.f32.mrb[0].mxu0
      %509 = vdwg.mxu0
      %v510 = vld [vmem:[#allocation2 + $0x4] sm:$0xf]
      %v511 = vld [vmem:[#allocation2 + $0x8] sm:$0xf]
      %v512 = vld [vmem:[#allocation2 + $0xc] sm:$0xf]
      %v513 = vld [vmem:[#allocation2 + $0x10] sm:$0x1]
      %s514 = scalar_lea.vmem %s1, 128
      %v515 = vld [vmem:[%s514] sm:$0xf]
      %v516 = vld [vmem:[%s514 + $0x4] sm:$0xf]
      %v517 = vld [vmem:[%s514 + $0x8] sm:$0xf]
      %v518 = vld [vmem:[%s514 + $0xc] sm:$0xf]
      %v519 = vld [vmem:[%s514 + $0x10] sm:$0xf]
      %v520 = vld [vmem:[%s514 + $0x14] sm:$0xf]
      %v521 = vld [vmem:[%s514 + $0x18] sm:$0xf]
      %v522 = vld [vmem:[%s514 + $0x1c] sm:$0xf]
      %v523 = vld [vmem:[%s514 + $0x20] sm:$0xf]
      %v524 = vld [vmem:[%s514 + $0x24] sm:$0xf]
      %v525 = vld [vmem:[%s514 + $0x28] sm:$0xf]
      %v526 = vld [vmem:[%s514 + $0x2c] sm:$0xf]
      %v527 = vld [vmem:[%s514 + $0x30] sm:$0xf]
      %v528 = vld [vmem:[%s514 + $0x34] sm:$0xf]
      %v529 = vld [vmem:[%s514 + $0x38] sm:$0xf]
      %v530 = vld [vmem:[%s514 + $0x3c] sm:$0xf]
      %v535 = vunpack.c.l.b16 %v510
      %v536 = vunpack.c.l.b16 %v511
      %v537 = vunpack.c.l.b16 %v512
      %v538 = vunpack.c.l.b16 %v513
      %v539 = vpack.c.b16 %v536, %v535
      %v540 = vpack.c.b16 %v538, %v537
      %vm541 = vsmask.f32 7424
      %v543 = vshrl.u32 %v539, 16
      %v545 = vshll.u32 %v539, 16
      %v547 = vrot.slane %v545, 1
      %v548 = vor.u32 %v543, %v547
      %v550 = vshll.u32 %v540, 16
      %v552 = vrot.slane %v550, 1
      %v553 = vsel %vm541, %v548, %v552
      %v554 = vshrl.u32 %v540, 16
      %v556 = vor.u32 %v554, %v552
      %v575 = vunpack.c.l.b16 %v515
      %v576 = vunpack.c.l.b16 %v516
      %v577 = vunpack.c.l.b16 %v517
      %v578 = vunpack.c.l.b16 %v518
      %v579 = vunpack.c.l.b16 %v519
      %v580 = vunpack.c.l.b16 %v520
      %v581 = vunpack.c.l.b16 %v521
      %v582 = vunpack.c.l.b16 %v522
      %v583 = vunpack.c.l.b16 %v523
      %v584 = vunpack.c.l.b16 %v524
      %v585 = vunpack.c.l.b16 %v525
      %v586 = vunpack.c.l.b16 %v526
      %v587 = vunpack.c.l.b16 %v527
      %v588 = vunpack.c.l.b16 %v528
      %v589 = vunpack.c.l.b16 %v529
      %v590 = vunpack.c.l.b16 %v530
      %v591 = vpack.c.b16 %v576, %v575
      %v592 = vpack.c.b16 %v578, %v577
      %v593 = vpack.c.b16 %v580, %v579
      %v594 = vpack.c.b16 %v582, %v581
      %v595 = vpack.c.b16 %v584, %v583
      %v596 = vpack.c.b16 %v586, %v585
      %v597 = vpack.c.b16 %v588, %v587
      %v598 = vpack.c.b16 %v590, %v589
      %607 = vmatprep.subr.bf16.mxu0 0
      %608 = vmatpush1.bf16.msra.mxu0 %v591
      %609 = vmatprep.subr.bf16.mxu0 0
      %610 = vmatpush1.bf16.msra.mxu0 %v592
      %611 = vmatprep.subr.bf16.mxu0 0
      %612 = vmatpush1.bf16.msra.mxu0 %v593
      %613 = vmatprep.subr.bf16.mxu0 0
      %614 = vmatpush1.bf16.msra.mxu0 %v594
      %615 = vmatprep.subr.bf16.mxu0 0
      %616 = vmatpush1.bf16.msra.mxu0 %v595
      %617 = vmatprep.subr.bf16.mxu0 0
      %618 = vmatpush1.bf16.msra.mxu0 %v596
      %619 = vmatprep.subr.bf16.mxu0 0
      %620 = vmatpush1.bf16.msra.mxu0 %v597
      %621 = vmatprep.subr.bf16.mxu0 0
      %622 = vmatpush1.bf16.msra.mxu0 %v598
      %623 = vmatprep.subr.bf16.mxu0 0
      %624 = vmatpush1.bf16.msra.mxu0 0
      %625 = vmatprep.subr.bf16.mxu0 0
      %626 = vmatpush1.bf16.msra.mxu0 0
      %627 = vmatprep.subr.bf16.mxu0 0
      %628 = vmatpush1.bf16.msra.mxu0 0
      %629 = vmatprep.subr.bf16.mxu0 0
      %630 = vmatpush1.bf16.msra.mxu0 0
      %631 = vmatprep.subr.bf16.mxu0 0
      %632 = vmatpush1.bf16.msra.mxu0 0
      %633 = vmatprep.subr.bf16.mxu0 0
      %634 = vmatpush1.bf16.msra.mxu0 0
      %635 = vmatprep.subr.bf16.mxu0 0
      %636 = vmatpush1.bf16.msra.mxu0 0
      %637 = vmatprep.subr.bf16.mxu0 0
      %638 = vmatpush1.bf16.msra.mxu0 0
      %639 = vmatprep.mubr.bf16.mxu0 0
      %640 = vmatmul.mubr.bf16.gmra.mrb[0].mxu0 %v553
      %v641 = vpop.f32.mrb[0].mxu0
      %v642 = vadd.f32 0.0, %v641
      %v643 = vpop.f32.mrb[0].mxu0
      %v644 = vpop.f32.mrb[0].mxu0
      %v645 = vadd.f32 0.0, %v644
      %v646 = vpop.f32.mrb[0].mxu0
      %647 = vmatprep.mubr.bf16.mxu0 0
      %648 = vmatmul.mubr.bf16.gmra.mrb[0].mxu0 %v556
      %v649 = vpop.f32.mrb[0].mxu0
      %v650 = vpop.f32.mrb[0].mxu0
      %v651 = vpop.f32.mrb[0].mxu0
      %v652 = vpop.f32.mrb[0].mxu0
      %653 = vdwg.mxu0
      %v654 = vadd.f32 %v498, %v642
      %v655 = vadd.f32 %v501, %v645
      %v656 = vpack.c.bf16 %v655, %v654
      %v658 = vunpack.c.l.b16 %v656
      %v659 = vunpack.c.h.b16 %v656
      %v660 = vpack.c.b16 %v658, %v658
      %v661 = vpack.c.b16 %v659, %v659
      %664 = vst [vmem:[%s231] sm:$0xf] %v660
      %665 = vst [vmem:[%s231 + $0x4] sm:$0xf] %v661
      %v666 = vadd.f32 %v654, %v655
      %v667 = vrot.slane %v666, 4
      %v668 = vadd.f32 %v666, %v667
      %v669 = vrot.slane %v668, 2
      %v670 = vadd.f32 %v668, %v669
      %v671 = vrot.slane %v670, 1
      %v672 = vadd.f32 %v670, %v671
      %v673 = vadd.f32 %v672, 0.0
      %v674 = vmul.f32 %v654, %v654
      %v675 = vmul.f32 %v655, %v655
      %v676 = vadd.f32 %v674, %v675
      %v677 = vrot.slane %v676, 4
      %v678 = vadd.f32 %v676, %v677
      %v679 = vrot.slane %v678, 2
      %v680 = vadd.f32 %v678, %v679
      %v681 = vrot.slane %v680, 1
      %v682 = vadd.f32 %v680, %v681
      %v683 = vadd.f32 %v682, 0.0
      %vm684 = vcmask 1040384
      %v685 = vsel %vm684, %v673, %v683
      %686 = vst [vmem:[%s235] sm:$0x3] %v685
      %p687 = scmp.lt.s32.totalorder %s17, 1
      %s688 = scalar_select %p687, %s17, 1
      %s689 = smul.addr %s688, 2
      %s690 = smul.addr %s689, 4
      %s691 = scalar_lea.vmem %s4, %s690
      %p692 = scmp.lt.s32.totalorder %s17, 1
      %s693 = scalar_select %p692, %s17, 1
      %s694 = smul.addr %s693, 2
      %s695 = scalar_lea.vmem %s5, %s694
      // Predicated region
      $region37: #{basic_block1d.3} parent=35 // pred_check
        %p696 = pneg %p124
      $region38: #{basic_block1d.3} parent=35 // pred_check_branch
        %698 = sbr.rel (%p696) target = $region40
      $region39: #{basic_block1d.3} parent=35 // pred_region
        _
      $region40: #{basic_block1d.3} parent=35 // pred_fallthru
        _
      // Predicated region
      $region41: #{basic_block1d.3} parent=35 // pred_check
        %p699 = pneg %p150
      $region42: #{basic_block1d.3} parent=35 // pred_check_branch
        %701 = sbr.rel (%p699) target = $region44
      $region43: #{basic_block1d.3} parent=35 // pred_region
        _
      $region44: #{basic_block1d.3} parent=35 // pred_fallthru
        _
    $region36: #{basic_block1d.3} parent=5 // pred_fallthru
      _
    %p702 = scmp.le.s32.totalorder 2, %s12
    // Predicated region
    $region45: #{basic_block1d.3} parent=5 // pred_check
      %p703 = pneg %p702
    $region46: #{basic_block1d.3} parent=5 // pred_check_branch
      %705 = sbr.rel (%p703) target = $region48
    $region47: #{basic_block1d.3} parent=5 // pred_region
      %s706 = ssub.s32 %s12, 2
      // Predicated region
      $region49: #{basic_block1d.3} parent=47 // pred_check
        %p707 = pneg %p130
      $region50: #{basic_block1d.3} parent=47 // pred_check_branch
        %709 = sbr.rel (%p707) target = $region52
      $region51: #{basic_block1d.3} parent=47 // pred_region
        %p710 = scmp.lt.s32.totalorder %s18, 1
        %s711 = scalar_select %p710, %s18, 1
        %s712 = smul.addr %s711, 2
        %s713 = smul.addr %s712, 4
        %s714 = scalar_lea.vmem %s4, %s713
      $region52: #{basic_block1d.3} parent=47 // pred_fallthru
        _
      // Predicated region
      $region53: #{basic_block1d.3} parent=47 // pred_check
        %p715 = pneg %p156
      $region54: #{basic_block1d.3} parent=47 // pred_check_branch
        %717 = sbr.rel (%p715) target = $region56
      $region55: #{basic_block1d.3} parent=47 // pred_region
        %p718 = scmp.lt.s32.totalorder %s18, 1
        %s719 = scalar_select %p718, %s18, 1
        %s720 = smul.addr %s719, 2
        %s721 = scalar_lea.vmem %s5, %s720
      $region56: #{basic_block1d.3} parent=47 // pred_fallthru
        _
    $region48: #{basic_block1d.3} parent=5 // pred_fallthru
      _
  $region6: #{basic_block1d.3} parent=0 // loop_footer
    %s16 = sadd.s32 1, %s12
  $region7: #{basic_block1d.3} parent=0 // loop_footer_branch
    %11 = sbr.rel target = $region3
  $region8: #{basic_block1d.3} parent=0 // loop_exit
    _

// kernel: basic_block1d.4
$region0: #{basic_block1d.4}
  #allocation0 [shape = 'u32[]', space=smem, size = 0x4, offset = 0x4, fixed_abs, tag = 'smem constant byte address 0x4 - core index']
  #allocation1 [shape = 'u32[144,128]{1,0:T(1,128)}', space=vmem, size = 0x12000, scoped, tag = 'internal scratch']
  #allocation2 [shape = 'bf16[40,128]{1,0:T(8,128)(2,1)}', space=vmem, size = 0x2800, scoped, tag = 'scratch operand']
  %s0 = inlined_call_operand.vmem [shape: bf16[2,16,128], index: 0, kind: input, shape index: {}]
  %s1 = inlined_call_operand.vmem [shape: bf16[3,128,128], index: 1, kind: input, shape index: {}]
  %s2 = inlined_call_operand.vmem [shape: f32[1,128], index: 2, kind: input, shape index: {}]
  %s3 = inlined_call_operand.vmem [shape: f32[1,128], index: 3, kind: input, shape index: {}]
  %s4 = inlined_call_operand.vmem [shape: bf16[2,16,128], index: 4, kind: output, shape index: {0}]
  %s5 = inlined_call_operand.vmem [shape: f32[2,2,128], index: 5, kind: output, shape index: {1}]
  %6 = xla_tuple %s4, %s5
  %s7 = sld [smem:[#allocation0]]
  $region57: #{basic_block1d.4} parent=0
    _
  %s9 = ssub.s32 1, %s7
  %s10 = scalar_select 0, %s9, %s7
  loop: start=0, step=1, limit=4
  $region2: #{basic_block1d.4} parent=0 // loop_pre_header
    _
  $region3: #{basic_block1d.4} parent=0 // loop_header
    %s12 = sphi 0, %s16
    %p13 = scmp.ge.s32.totalorder %s12, 4
    %s22 = sphi 0, %s24
    %s25 = sphi 0, %s22
    %s26 = sphi 0, %s25
    %s42 = sphi 0, %s26
    %s46 = sphi 0, %s46
    %s48 = sphi 0, %s46
    %s49 = sphi 0, %s48
    %s63 = sphi 0, %s49
    %s67 = sphi 0, %s67
    %s69 = sphi 0, %s67
    %s70 = sphi 0, %s69
    %s84 = sphi 0, %s70
    %s88 = sphi 0, %s88
    %s90 = sphi 0, %s88
    %s91 = sphi 0, %s90
    %s105 = sphi 0, %s91
    %s111 = sphi 0, %s113
    %s114 = sphi 0, %s111
    %s115 = sphi 0, %s114
    %s131 = sphi 0, %s115
    %s137 = sphi 0, %s139
    %s140 = sphi 0, %s137
    %s141 = sphi 0, %s140
    %s157 = sphi 0, %s141
  $region4: #{basic_block1d.4} parent=0 // loop_header_branch
    %15 = sbr.rel (%p13) target = $region8
  $region5: #{basic_block1d.4} parent=0 // loop_body
    %s17 = ssub.s32 %s12, 1
    %s18 = ssub.s32 %s12, 2
    %s19 = sadd.s32 %s12, 1
    %s20 = ssub.s32 %s12, %s19
    %p21 = scmp.eq.s32.totalorder %s20, 0
    %s23 = sadd.s32 %s22, 1
    %s24 = scalar_select %p21, %s22, %s23
    %p27 = pneg %p21
    %p28 = scmp.eq.s32.totalorder %s12, 1
    %p29 = por %p27, %p28
    %p30 = scmp.ne.s32.totalorder %s22, %s25
    %p31 = scmp.eq.s32.totalorder %s12, 0
    %p32 = por %p30, %p31
    %p33 = scmp.ne.s32.totalorder %s22, %s25
    %p34 = scmp.eq.s32.totalorder %s17, 1
    %p35 = por %p33, %p34
    %p36 = scmp.ne.s32.totalorder %s25, %s26
    %p37 = scmp.eq.s32.totalorder %s17, 0
    %p38 = por %p36, %p37
    %p39 = scmp.ne.s32.totalorder %s25, %s26
    %p40 = scmp.eq.s32.totalorder %s18, 1
    %p41 = por %p39, %p40
    %p43 = scmp.ne.s32.totalorder %s26, %s42
    %p44 = scmp.eq.s32.totalorder %s18, 0
    %p45 = por %p43, %p44
    %s47 = sadd.s32 %s46, 1
    %p50 = scmp.eq.s32.totalorder %s12, 1
    %p51 = scmp.ne.s32.totalorder %s46, %s48
    %p52 = scmp.eq.s32.totalorder %s12, 0
    %p53 = por %p51, %p52
    %p54 = scmp.ne.s32.totalorder %s46, %s48
    %p55 = scmp.eq.s32.totalorder %s17, 1
    %p56 = por %p54, %p55
    %p57 = scmp.ne.s32.totalorder %s48, %s49
    %p58 = scmp.eq.s32.totalorder %s17, 0
    %p59 = por %p57, %p58
    %p60 = scmp.ne.s32.totalorder %s48, %s49
    %p61 = scmp.eq.s32.totalorder %s18, 1
    %p62 = por %p60, %p61
    %p64 = scmp.ne.s32.totalorder %s49, %s63
    %p65 = scmp.eq.s32.totalorder %s18, 0
    %p66 = por %p64, %p65
    %s68 = sadd.s32 %s67, 1
    %p71 = scmp.eq.s32.totalorder %s12, 1
    %p72 = scmp.ne.s32.totalorder %s67, %s69
    %p73 = scmp.eq.s32.totalorder %s12, 0
    %p74 = por %p72, %p73
    %p75 = scmp.ne.s32.totalorder %s67, %s69
    %p76 = scmp.eq.s32.totalorder %s17, 1
    %p77 = por %p75, %p76
    %p78 = scmp.ne.s32.totalorder %s69, %s70
    %p79 = scmp.eq.s32.totalorder %s17, 0
    %p80 = por %p78, %p79
    %p81 = scmp.ne.s32.totalorder %s69, %s70
    %p82 = scmp.eq.s32.totalorder %s18, 1
    %p83 = por %p81, %p82
    %p85 = scmp.ne.s32.totalorder %s70, %s84
    %p86 = scmp.eq.s32.totalorder %s18, 0
    %p87 = por %p85, %p86
    %s89 = sadd.s32 %s88, 1
    %p92 = scmp.eq.s32.totalorder %s12, 1
    %p93 = scmp.ne.s32.totalorder %s88, %s90
    %p94 = scmp.eq.s32.totalorder %s12, 0
    %p95 = por %p93, %p94
    %p96 = scmp.ne.s32.totalorder %s88, %s90
    %p97 = scmp.eq.s32.totalorder %s17, 1
    %p98 = por %p96, %p97
    %p99 = scmp.ne.s32.totalorder %s90, %s91
    %p100 = scmp.eq.s32.totalorder %s17, 0
    %p101 = por %p99, %p100
    %p102 = scmp.ne.s32.totalorder %s90, %s91
    %p103 = scmp.eq.s32.totalorder %s18, 1
    %p104 = por %p102, %p103
    %p106 = scmp.ne.s32.totalorder %s91, %s105
    %p107 = scmp.eq.s32.totalorder %s18, 0
    %p108 = por %p106, %p107
    %s109 = ssub.s32 %s12, %s19
    %p110 = scmp.eq.s32.totalorder %s109, 0
    %s112 = sadd.s32 %s111, 1
    %s113 = scalar_select %p110, %s111, %s112
    %p116 = pneg %p110
    %p117 = scmp.eq.s32.totalorder %s12, 1
    %p118 = por %p116, %p117
    %p119 = scmp.ne.s32.totalorder %s111, %s114
    %p120 = scmp.eq.s32.totalorder %s12, 0
    %p121 = por %p119, %p120
    %p122 = scmp.ne.s32.totalorder %s111, %s114
    %p123 = scmp.eq.s32.totalorder %s17, 1
    %p124 = por %p122, %p123
    %p125 = scmp.ne.s32.totalorder %s114, %s115
    %p126 = scmp.eq.s32.totalorder %s17, 0
    %p127 = por %p125, %p126
    %p128 = scmp.ne.s32.totalorder %s114, %s115
    %p129 = scmp.eq.s32.totalorder %s18, 1
    %p130 = por %p128, %p129
    %p132 = scmp.ne.s32.totalorder %s115, %s131
    %p133 = scmp.eq.s32.totalorder %s18, 0
    %p134 = por %p132, %p133
    %s135 = ssub.s32 %s12, %s19
    %p136 = scmp.eq.s32.totalorder %s135, 0
    %s138 = sadd.s32 %s137, 1
    %s139 = scalar_select %p136, %s137, %s138
    %p142 = pneg %p136
    %p143 = scmp.eq.s32.totalorder %s12, 1
    %p144 = por %p142, %p143
    %p145 = scmp.ne.s32.totalorder %s137, %s140
    %p146 = scmp.eq.s32.totalorder %s12, 0
    %p147 = por %p145, %p146
    %p148 = scmp.ne.s32.totalorder %s137, %s140
    %p149 = scmp.eq.s32.totalorder %s17, 1
    %p150 = por %p148, %p149
    %p151 = scmp.ne.s32.totalorder %s140, %s141
    %p152 = scmp.eq.s32.totalorder %s17, 0
    %p153 = por %p151, %p152
    %p154 = scmp.ne.s32.totalorder %s140, %s141
    %p155 = scmp.eq.s32.totalorder %s18, 1
    %p156 = por %p154, %p155
    %p158 = scmp.ne.s32.totalorder %s141, %s157
    %p159 = scmp.eq.s32.totalorder %s18, 0
    %p160 = por %p158, %p159
    %p161 = scmp.le.s32.totalorder 1, %s12
    %p162 = scmp.lt.s32.totalorder %s12, 3
    %p163 = pnand %p161, %p162
    %p164 = pneg %p163
    // Predicated region
    $region9: #{basic_block1d.4} parent=5 // pred_check
      _
    $region10: #{basic_block1d.4} parent=5 // pred_check_branch
      %166 = sbr.rel (%p163) target = $region12
    $region11: #{basic_block1d.4} parent=5 // pred_region
      %s167 = ssub.s32 %s12, 1
      // Predicated region
      $region13: #{basic_block1d.4} parent=11 // pred_check
        %p168 = pneg %p59
      $region14: #{basic_block1d.4} parent=11 // pred_check_branch
        %170 = sbr.rel (%p168) target = $region16
      $region15: #{basic_block1d.4} parent=11 // pred_region
        _
      $region16: #{basic_block1d.4} parent=11 // pred_fallthru
        _
      // Predicated region
      $region17: #{basic_block1d.4} parent=11 // pred_check
        %p171 = pneg %p80
      $region18: #{basic_block1d.4} parent=11 // pred_check_branch
        %173 = sbr.rel (%p171) target = $region20
      $region19: #{basic_block1d.4} parent=11 // pred_region
        _
      $region20: #{basic_block1d.4} parent=11 // pred_fallthru
        _
      // Predicated region
      $region21: #{basic_block1d.4} parent=11 // pred_check
        %p174 = pneg %p101
      $region22: #{basic_block1d.4} parent=11 // pred_check_branch
        %176 = sbr.rel (%p174) target = $region24
      $region23: #{basic_block1d.4} parent=11 // pred_region
        _
      $region24: #{basic_block1d.4} parent=11 // pred_fallthru
        _
    $region12: #{basic_block1d.4} parent=5 // pred_fallthru
      _
    %p177 = scmp.lt.s32.totalorder %s12, 2
    // Predicated region
    $region25: #{basic_block1d.4} parent=5 // pred_check
      %p178 = pneg %p177
    $region26: #{basic_block1d.4} parent=5 // pred_check_branch
      %180 = sbr.rel (%p178) target = $region28
    $region27: #{basic_block1d.4} parent=5 // pred_region
      // Predicated region
      $region29: #{basic_block1d.4} parent=27 // pred_check
        %p181 = pneg %p32
      $region30: #{basic_block1d.4} parent=27 // pred_check_branch
        %183 = sbr.rel (%p181) target = $region32
      $region31: #{basic_block1d.4} parent=27 // pred_region
        %p184 = scmp.lt.s32.totalorder %s12, 1
        %s185 = scalar_select %p184, %s12, 1
        %s186 = smul.addr %s185, 2
        %s187 = smul.addr %s186, 4
        %s188 = scalar_lea.vmem %s0, %s187
      $region32: #{basic_block1d.4} parent=27 // pred_fallthru
        _
    $region28: #{basic_block1d.4} parent=5 // pred_fallthru
      _
    %p189 = scmp.le.s32.totalorder 1, %s12
    %p190 = scmp.lt.s32.totalorder %s12, 3
    %p191 = pnand %p189, %p190
    %p192 = pneg %p191
    // Predicated region
    $region33: #{basic_block1d.4} parent=5 // pred_check
      _
    $region34: #{basic_block1d.4} parent=5 // pred_check_branch
      %194 = sbr.rel (%p191) target = $region36
    $region35: #{basic_block1d.4} parent=5 // pred_region
      %s195 = ssub.s32 %s12, 1
      %p196 = scmp.lt.s32.totalorder %s17, 1
      %s197 = scalar_select %p196, %s17, 1
      %s198 = smul.addr %s197, 2
      %s199 = smul.addr %s198, 4
      %s200 = scalar_lea.vmem %s0, %s199
      %p201 = pneg %p38
      %p202 = pneg %p35
      %p203 = pneg %p59
      %p204 = pneg %p56
      %p205 = pneg %p80
      %p206 = pneg %p77
      %p207 = pneg %p101
      %p208 = pneg %p98
      %p209 = pneg %p127
      %p210 = pneg %p124
      %p211 = scmp.lt.s32.totalorder %s17, 1
      %s212 = scalar_select %p211, %s17, 1
      %s213 = smul.addr %s212, 2
      %s214 = smul.addr %s213, 4
      %s215 = scalar_lea.vmem %s4, %s214
      %p216 = pneg %p153
      %p217 = pneg %p150
      %p218 = scmp.lt.s32.totalorder %s17, 1
      %s219 = scalar_select %p218, %s17, 1
      %s220 = smul.addr %s219, 2
      %s221 = scalar_lea.vmem %s5, %s220
      %p222 = scmp.lt.s32.totalorder %s17, 1
      %s223 = scalar_select %p222, %s17, 1
      %s224 = smul.addr %s223, 2
      %s225 = smul.addr %s224, 4
      %s226 = scalar_lea.vmem %s0, %s225
      %p227 = scmp.lt.s32.totalorder %s17, 1
      %s228 = scalar_select %p227, %s17, 1
      %s229 = smul.addr %s228, 2
      %s230 = smul.addr %s229, 4
      %s231 = scalar_lea.vmem %s4, %s230
      %p232 = scmp.lt.s32.totalorder %s17, 1
      %s233 = scalar_select %p232, %s17, 1
      %s234 = smul.addr %s233, 2
      %s235 = scalar_lea.vmem %s5, %s234
      %v237 = vld [vmem:[%s2] sm:$0x1]
      %v238 = vld [vmem:[%s3] sm:$0x1]
      %vm239 = vcmask 1043459
      %vm240 = vsmask.f32 7950
      %vm241 = vmand %vm239, %vm240
      %v242 = vld [vmem:[#allocation2] sm:$0x8]
      %v243 = vsel %vm241, 0, %v242
      %244 = vst [vmem:[#allocation2] sm:$0x8] %v243
      %245 = vst [vmem:[#allocation2 + $0x10] sm:$0xf] 0
      %v246 = vld [vmem:[%s226] sm:$0xf]
      %v247 = vld [vmem:[%s226 + $0x4] sm:$0xf]
      %v248 = vunpack.c.l.bf16 %v246
      %v249 = vunpack.c.l.bf16 %v247
      %v251 = vlaneseq
      %v252 = vshrl.u32 %v251, 7
      %v253 = vsub.s32 0, %v252
      %v254 = vrot.slane %v237, %v253
      %v256 = vmul.f32 %v248, %v254
      %v257 = vmul.f32 %v249, %v254
      %v259 = vlaneseq
      %v260 = vshrl.u32 %v259, 7
      %v261 = vsub.s32 0, %v260
      %v262 = vrot.slane %v238, %v261
      %v264 = vadd.f32 %v256, %v262
      %v265 = vadd.f32 %v257, %v262
      %v266 = vmax.f32 %v264, 0.0
      %v267 = vmax.f32 %v265, 0.0
      %v268 = vpack.c.bf16 %v267, %v266
      %v270 = vunpack.c.l.b16 %v268
      %v271 = vunpack.c.h.b16 %v268
      %v272 = vpack.c.b16 %v270, %v270
      %v273 = vpack.c.b16 %v271, %v271
      %276 = vst [vmem:[#allocation2 + $0x4] sm:$0xf] %v272
      %277 = vst [vmem:[#allocation2 + $0x8] sm:$0xf] %v273
      %278 = vst [vmem:[#allocation2 + $0xc] sm:$0xf] 0
      %v279 = vld [vmem:[#allocation2] sm:$0x8]
      %v280 = vld [vmem:[#allocation2 + $0x4] sm:$0xf]
      %v281 = vld [vmem:[#allocation2 + $0x8] sm:$0xf]
      %v282 = vld [vmem:[#allocation2 + $0xc] sm:$0xf]
      %v283 = vld [vmem:[%s1] sm:$0xf]
      %v284 = vld [vmem:[%s1 + $0x4] sm:$0xf]
      %v285 = vld [vmem:[%s1 + $0x8] sm:$0xf]
      %v286 = vld [vmem:[%s1 + $0xc] sm:$0xf]
      %v287 = vld [vmem:[%s1 + $0x10] sm:$0xf]
      %v288 = vld [vmem:[%s1 + $0x14] sm:$0xf]
      %v289 = vld [vmem:[%s1 + $0x18] sm:$0xf]
      %v290 = vld [vmem:[%s1 + $0x1c] sm:$0xf]
      %v291 = vld [vmem:[%s1 + $0x20] sm:$0xf]
      %v292 = vld [vmem:[%s1 + $0x24] sm:$0xf]
      %v293 = vld [vmem:[%s1 + $0x28] sm:$0xf]
      %v294 = vld [vmem:[%s1 + $0x2c] sm:$0xf]
      %v295 = vld [vmem:[%s1 + $0x30] sm:$0xf]
      %v296 = vld [vmem:[%s1 + $0x34] sm:$0xf]
      %v297 = vld [vmem:[%s1 + $0x38] sm:$0xf]
      %v298 = vld [vmem:[%s1 + $0x3c] sm:$0xf]
      %s299 = scalar_lea.vmem %s1, 64
      %v300 = vld [vmem:[%s299] sm:$0xf]
      %v301 = vld [vmem:[%s299 + $0x4] sm:$0xf]
      %v302 = vld [vmem:[%s299 + $0x8] sm:$0xf]
      %v303 = vld [vmem:[%s299 + $0xc] sm:$0xf]
      %v304 = vld [vmem:[%s299 + $0x10] sm:$0xf]
      %v305 = vld [vmem:[%s299 + $0x14] sm:$0xf]
      %v306 = vld [vmem:[%s299 + $0x18] sm:$0xf]
      %v307 = vld [vmem:[%s299 + $0x1c] sm:$0xf]
      %v308 = vld [vmem:[%s299 + $0x20] sm:$0xf]
      %v309 = vld [vmem:[%s299 + $0x24] sm:$0xf]
      %v310 = vld [vmem:[%s299 + $0x28] sm:$0xf]
      %v311 = vld [vmem:[%s299 + $0x2c] sm:$0xf]
      %v312 = vld [vmem:[%s299 + $0x30] sm:$0xf]
      %v313 = vld [vmem:[%s299 + $0x34] sm:$0xf]
      %v314 = vld [vmem:[%s299 + $0x38] sm:$0xf]
      %v315 = vld [vmem:[%s299 + $0x3c] sm:$0xf]
      %v319 = vunpack.c.l.b16 %v280
      %v320 = vunpack.c.l.b16 %v281
      %v321 = vunpack.c.l.b16 %v282
      %v322 = vpack.c.b16 %v320, %v319
      %v323 = vpack.c.b16 %v321, %v321
      %v342 = vunpack.c.l.b16 %v300
      %v343 = vunpack.c.l.b16 %v301
      %v344 = vunpack.c.l.b16 %v302
      %v345 = vunpack.c.l.b16 %v303
      %v346 = vunpack.c.l.b16 %v304
      %v347 = vunpack.c.l.b16 %v305
      %v348 = vunpack.c.l.b16 %v306
      %v349 = vunpack.c.l.b16 %v307
      %v350 = vunpack.c.l.b16 %v308
      %v351 = vunpack.c.l.b16 %v309
      %v352 = vunpack.c.l.b16 %v310
      %v353 = vunpack.c.l.b16 %v311
      %v354 = vunpack.c.l.b16 %v312
      %v355 = vunpack.c.l.b16 %v313
      %v356 = vunpack.c.l.b16 %v314
      %v357 = vunpack.c.l.b16 %v315
      %v358 = vpack.c.b16 %v343, %v342
      %v359 = vpack.c.b16 %v345, %v344
      %v360 = vpack.c.b16 %v347, %v346
      %v361 = vpack.c.b16 %v349, %v348
      %v362 = vpack.c.b16 %v351, %v350
      %v363 = vpack.c.b16 %v353, %v352
      %v364 = vpack.c.b16 %v355, %v354
      %v365 = vpack.c.b16 %v357, %v356
      %374 = vmatprep.subr.bf16.mxu0 0
      %375 = vmatpush1.bf16.msra.mxu0 %v358
      %376 = vmatprep.subr.bf16.mxu0 0
      %377 = vmatpush1.bf16.msra.mxu0 %v359
      %378 = vmatprep.subr.bf16.mxu0 0
      %379 = vmatpush1.bf16.msra.mxu0 %v360
      %380 = vmatprep.subr.bf16.mxu0 0
      %381 = vmatpush1.bf16.msra.mxu0 %v361
      %382 = vmatprep.subr.bf16.mxu0 0
      %383 = vmatpush1.bf16.msra.mxu0 %v362
      %384 = vmatprep.subr.bf16.mxu0 0
      %385 = vmatpush1.bf16.msra.mxu0 %v363
      %386 = vmatprep.subr.bf16.mxu0 0
      %387 = vmatpush1.bf16.msra.mxu0 %v364
      %388 = vmatprep.subr.bf16.mxu0 0
      %389 = vmatpush1.bf16.msra.mxu0 %v365
      %390 = vmatprep.subr.bf16.mxu0 0
      %391 = vmatpush1.bf16.msra.mxu0 0
      %392 = vmatprep.subr.bf16.mxu0 0
      %393 = vmatpush1.bf16.msra.mxu0 0
      %394 = vmatprep.subr.bf16.mxu0 0
      %395 = vmatpush1.bf16.msra.mxu0 0
      %396 = vmatprep.subr.bf16.mxu0 0
      %397 = vmatpush1.bf16.msra.mxu0 0
      %398 = vmatprep.subr.bf16.mxu0 0
      %399 = vmatpush1.bf16.msra.mxu0 0
      %400 = vmatprep.subr.bf16.mxu0 0
      %401 = vmatpush1.bf16.msra.mxu0 0
      %402 = vmatprep.subr.bf16.mxu0 0
      %403 = vmatpush1.bf16.msra.mxu0 0
      %404 = vmatprep.subr.bf16.mxu0 0
      %405 = vmatpush1.bf16.msra.mxu0 0
      %406 = vmatprep.mubr.bf16.mxu0 0
      %407 = vmatmul.mubr.bf16.gmra.mrb[0].mxu0 %v322
      %v408 = vpop.f32.mrb[0].mxu0
      %v409 = vadd.f32 0.0, %v408
      %v410 = vpop.f32.mrb[0].mxu0
      %v411 = vpop.f32.mrb[0].mxu0
      %v412 = vadd.f32 0.0, %v411
      %v413 = vpop.f32.mrb[0].mxu0
      %414 = vmatprep.mubr.bf16.mxu0 0
      %415 = vmatmul.mubr.bf16.gmra.mrb[0].mxu0 %v323
      %v416 = vpop.f32.mrb[0].mxu0
      %v417 = vpop.f32.mrb[0].mxu0
      %v418 = vpop.f32.mrb[0].mxu0
      %v419 = vpop.f32.mrb[0].mxu0
      %420 = vdwg.mxu0
      %v422 = vunpack.c.l.b16 %v279
      %v423 = vpack.c.b16 %v319, %v422
      %v424 = vpack.c.b16 %v321, %v320
      %vm425 = vsmask.f32 4352
      %v427 = vshrl.u32 %v423, 16
      %v429 = vrot.slane %v427, 3
      %v430 = vshll.u32 %v423, 16
      %v432 = vrot.slane %v430, 4
      %v433 = vor.u32 %v429, %v432
      %v435 = vshrl.u32 %v424, 16
      %v437 = vrot.slane %v435, 3
      %v438 = vshll.u32 %v424, 16
      %v440 = vrot.slane %v438, 4
      %v441 = vor.u32 %v437, %v440
      %v442 = vsel %vm425, %v433, %v441
      %v461 = vunpack.c.l.b16 %v283
      %v462 = vunpack.c.l.b16 %v284
      %v463 = vunpack.c.l.b16 %v285
      %v464 = vunpack.c.l.b16 %v286
      %v465 = vunpack.c.l.b16 %v287
      %v466 = vunpack.c.l.b16 %v288
      %v467 = vunpack.c.l.b16 %v289
      %v468 = vunpack.c.l.b16 %v290
      %v469 = vunpack.c.l.b16 %v291
      %v470 = vunpack.c.l.b16 %v292
      %v471 = vunpack.c.l.b16 %v293
      %v472 = vunpack.c.l.b16 %v294
      %v473 = vunpack.c.l.b16 %v295
      %v474 = vunpack.c.l.b16 %v296
      %v475 = vunpack.c.l.b16 %v297
      %v476 = vunpack.c.l.b16 %v298
      %v477 = vpack.c.b16 %v462, %v461
      %v478 = vpack.c.b16 %v464, %v463
      %v479 = vpack.c.b16 %v466, %v465
      %v480 = vpack.c.b16 %v468, %v467
      %v481 = vpack.c.b16 %v470, %v469
      %v482 = vpack.c.b16 %v472, %v471
      %v483 = vpack.c.b16 %v474, %v473
      %v484 = vpack.c.b16 %v476, %v475
      %493 = vmatprep.subr.bf16.mxu0 0
      %494 = vmatpush1.bf16.msra.mxu0 %v477
      %495 = vmatprep.subr.bf16.mxu0 0
      %496 = vmatpush1.bf16.msra.mxu0 %v478
      %497 = vmatprep.subr.bf16.mxu0 0
      %498 = vmatpush1.bf16.msra.mxu0 %v479
      %499 = vmatprep.subr.bf16.mxu0 0
      %500 = vmatpush1.bf16.msra.mxu0 %v480
      %501 = vmatprep.subr.bf16.mxu0 0
      %502 = vmatpush1.bf16.msra.mxu0 %v481
      %503 = vmatprep.subr.bf16.mxu0 0
      %504 = vmatpush1.bf16.msra.mxu0 %v482
      %505 = vmatprep.subr.bf16.mxu0 0
      %506 = vmatpush1.bf16.msra.mxu0 %v483
      %507 = vmatprep.subr.bf16.mxu0 0
      %508 = vmatpush1.bf16.msra.mxu0 %v484
      %509 = vmatprep.subr.bf16.mxu0 0
      %510 = vmatpush1.bf16.msra.mxu0 0
      %511 = vmatprep.subr.bf16.mxu0 0
      %512 = vmatpush1.bf16.msra.mxu0 0
      %513 = vmatprep.subr.bf16.mxu0 0
      %514 = vmatpush1.bf16.msra.mxu0 0
      %515 = vmatprep.subr.bf16.mxu0 0
      %516 = vmatpush1.bf16.msra.mxu0 0
      %517 = vmatprep.subr.bf16.mxu0 0
      %518 = vmatpush1.bf16.msra.mxu0 0
      %519 = vmatprep.subr.bf16.mxu0 0
      %520 = vmatpush1.bf16.msra.mxu0 0
      %521 = vmatprep.subr.bf16.mxu0 0
      %522 = vmatpush1.bf16.msra.mxu0 0
      %523 = vmatprep.subr.bf16.mxu0 0
      %524 = vmatpush1.bf16.msra.mxu0 0
      %525 = vmatprep.mubr.bf16.mxu0 0
      %526 = vmatmul.mubr.bf16.gmra.mrb[0].mxu0 %v442
      %v527 = vpop.f32.mrb[0].mxu0
      %v528 = vadd.f32 %v409, %v527
      %v529 = vpop.f32.mrb[0].mxu0
      %v530 = vpop.f32.mrb[0].mxu0
      %v531 = vadd.f32 %v412, %v530
      %v532 = vpop.f32.mrb[0].mxu0
      %533 = vmatprep.mubr.bf16.mxu0 0
      %534 = vmatmul.mubr.bf16.gmra.mrb[0].mxu0 %v441
      %v535 = vpop.f32.mrb[0].mxu0
      %v536 = vpop.f32.mrb[0].mxu0
      %v537 = vpop.f32.mrb[0].mxu0
      %v538 = vpop.f32.mrb[0].mxu0
      %539 = vdwg.mxu0
      %v540 = vld [vmem:[#allocation2 + $0x4] sm:$0xf]
      %v541 = vld [vmem:[#allocation2 + $0x8] sm:$0xf]
      %v542 = vld [vmem:[#allocation2 + $0xc] sm:$0xf]
      %v543 = vld [vmem:[#allocation2 + $0x10] sm:$0x1]
      %s544 = scalar_lea.vmem %s1, 128
      %v545 = vld [vmem:[%s544] sm:$0xf]
      %v546 = vld [vmem:[%s544 + $0x4] sm:$0xf]
      %v547 = vld [vmem:[%s544 + $0x8] sm:$0xf]
      %v548 = vld [vmem:[%s544 + $0xc] sm:$0xf]
      %v549 = vld [vmem:[%s544 + $0x10] sm:$0xf]
      %v550 = vld [vmem:[%s544 + $0x14] sm:$0xf]
      %v551 = vld [vmem:[%s544 + $0x18] sm:$0xf]
      %v552 = vld [vmem:[%s544 + $0x1c] sm:$0xf]
      %v553 = vld [vmem:[%s544 + $0x20] sm:$0xf]
      %v554 = vld [vmem:[%s544 + $0x24] sm:$0xf]
      %v555 = vld [vmem:[%s544 + $0x28] sm:$0xf]
      %v556 = vld [vmem:[%s544 + $0x2c] sm:$0xf]
      %v557 = vld [vmem:[%s544 + $0x30] sm:$0xf]
      %v558 = vld [vmem:[%s544 + $0x34] sm:$0xf]
      %v559 = vld [vmem:[%s544 + $0x38] sm:$0xf]
      %v560 = vld [vmem:[%s544 + $0x3c] sm:$0xf]
      %v565 = vunpack.c.l.b16 %v540
      %v566 = vunpack.c.l.b16 %v541
      %v567 = vunpack.c.l.b16 %v542
      %v568 = vunpack.c.l.b16 %v543
      %v569 = vpack.c.b16 %v566, %v565
      %v570 = vpack.c.b16 %v568, %v567
      %vm571 = vsmask.f32 7424
      %v573 = vshrl.u32 %v569, 16
      %v575 = vshll.u32 %v569, 16
      %v577 = vrot.slane %v575, 1
      %v578 = vor.u32 %v573, %v577
      %v580 = vshll.u32 %v570, 16
      %v582 = vrot.slane %v580, 1
      %v583 = vsel %vm571, %v578, %v582
      %v584 = vshrl.u32 %v570, 16
      %v586 = vor.u32 %v584, %v582
      %v605 = vunpack.c.l.b16 %v545
      %v606 = vunpack.c.l.b16 %v546
      %v607 = vunpack.c.l.b16 %v547
      %v608 = vunpack.c.l.b16 %v548
      %v609 = vunpack.c.l.b16 %v549
      %v610 = vunpack.c.l.b16 %v550
      %v611 = vunpack.c.l.b16 %v551
      %v612 = vunpack.c.l.b16 %v552
      %v613 = vunpack.c.l.b16 %v553
      %v614 = vunpack.c.l.b16 %v554
      %v615 = vunpack.c.l.b16 %v555
      %v616 = vunpack.c.l.b16 %v556
      %v617 = vunpack.c.l.b16 %v557
      %v618 = vunpack.c.l.b16 %v558
      %v619 = vunpack.c.l.b16 %v559
      %v620 = vunpack.c.l.b16 %v560
      %v621 = vpack.c.b16 %v606, %v605
      %v622 = vpack.c.b16 %v608, %v607
      %v623 = vpack.c.b16 %v610, %v609
      %v624 = vpack.c.b16 %v612, %v611
      %v625 = vpack.c.b16 %v614, %v613
      %v626 = vpack.c.b16 %v616, %v615
      %v627 = vpack.c.b16 %v618, %v617
      %v628 = vpack.c.b16 %v620, %v619
      %637 = vmatprep.subr.bf16.mxu0 0
      %638 = vmatpush1.bf16.msra.mxu0 %v621
      %639 = vmatprep.subr.bf16.mxu0 0
      %640 = vmatpush1.bf16.msra.mxu0 %v622
      %641 = vmatprep.subr.bf16.mxu0 0
      %642 = vmatpush1.bf16.msra.mxu0 %v623
      %643 = vmatprep.subr.bf16.mxu0 0
      %644 = vmatpush1.bf16.msra.mxu0 %v624
      %645 = vmatprep.subr.bf16.mxu0 0
      %646 = vmatpush1.bf16.msra.mxu0 %v625
      %647 = vmatprep.subr.bf16.mxu0 0
      %648 = vmatpush1.bf16.msra.mxu0 %v626
      %649 = vmatprep.subr.bf16.mxu0 0
      %650 = vmatpush1.bf16.msra.mxu0 %v627
      %651 = vmatprep.subr.bf16.mxu0 0
      %652 = vmatpush1.bf16.msra.mxu0 %v628
      %653 = vmatprep.subr.bf16.mxu0 0
      %654 = vmatpush1.bf16.msra.mxu0 0
      %655 = vmatprep.subr.bf16.mxu0 0
      %656 = vmatpush1.bf16.msra.mxu0 0
      %657 = vmatprep.subr.bf16.mxu0 0
      %658 = vmatpush1.bf16.msra.mxu0 0
      %659 = vmatprep.subr.bf16.mxu0 0
      %660 = vmatpush1.bf16.msra.mxu0 0
      %661 = vmatprep.subr.bf16.mxu0 0
      %662 = vmatpush1.bf16.msra.mxu0 0
      %663 = vmatprep.subr.bf16.mxu0 0
      %664 = vmatpush1.bf16.msra.mxu0 0
      %665 = vmatprep.subr.bf16.mxu0 0
      %666 = vmatpush1.bf16.msra.mxu0 0
      %667 = vmatprep.subr.bf16.mxu0 0
      %668 = vmatpush1.bf16.msra.mxu0 0
      %669 = vmatprep.mubr.bf16.mxu0 0
      %670 = vmatmul.mubr.bf16.gmra.mrb[0].mxu0 %v583
      %v671 = vpop.f32.mrb[0].mxu0
      %v672 = vadd.f32 0.0, %v671
      %v673 = vpop.f32.mrb[0].mxu0
      %v674 = vpop.f32.mrb[0].mxu0
      %v675 = vadd.f32 0.0, %v674
      %v676 = vpop.f32.mrb[0].mxu0
      %677 = vmatprep.mubr.bf16.mxu0 0
      %678 = vmatmul.mubr.bf16.gmra.mrb[0].mxu0 %v586
      %v679 = vpop.f32.mrb[0].mxu0
      %v680 = vpop.f32.mrb[0].mxu0
      %v681 = vpop.f32.mrb[0].mxu0
      %v682 = vpop.f32.mrb[0].mxu0
      %683 = vdwg.mxu0
      %v684 = vadd.f32 %v528, %v672
      %v685 = vadd.f32 %v531, %v675
      %v686 = vpack.c.bf16 %v685, %v684
      %v688 = vunpack.c.l.b16 %v686
      %v689 = vunpack.c.h.b16 %v686
      %v690 = vpack.c.b16 %v688, %v688
      %v691 = vpack.c.b16 %v689, %v689
      %694 = vst [vmem:[%s231] sm:$0xf] %v690
      %695 = vst [vmem:[%s231 + $0x4] sm:$0xf] %v691
      %v696 = vadd.f32 %v684, %v685
      %v697 = vrot.slane %v696, 4
      %v698 = vadd.f32 %v696, %v697
      %v699 = vrot.slane %v698, 2
      %v700 = vadd.f32 %v698, %v699
      %v701 = vrot.slane %v700, 1
      %v702 = vadd.f32 %v700, %v701
      %v703 = vadd.f32 %v702, 0.0
      %v704 = vmul.f32 %v684, %v684
      %v705 = vmul.f32 %v685, %v685
      %v706 = vadd.f32 %v704, %v705
      %v707 = vrot.slane %v706, 4
      %v708 = vadd.f32 %v706, %v707
      %v709 = vrot.slane %v708, 2
      %v710 = vadd.f32 %v708, %v709
      %v711 = vrot.slane %v710, 1
      %v712 = vadd.f32 %v710, %v711
      %v713 = vadd.f32 %v712, 0.0
      %vm714 = vcmask 1040384
      %v715 = vsel %vm714, %v703, %v713
      %716 = vst [vmem:[%s235] sm:$0x3] %v715
      %p717 = scmp.lt.s32.totalorder %s17, 1
      %s718 = scalar_select %p717, %s17, 1
      %s719 = smul.addr %s718, 2
      %s720 = smul.addr %s719, 4
      %s721 = scalar_lea.vmem %s4, %s720
      %p722 = scmp.lt.s32.totalorder %s17, 1
      %s723 = scalar_select %p722, %s17, 1
      %s724 = smul.addr %s723, 2
      %s725 = scalar_lea.vmem %s5, %s724
      // Predicated region
      $region37: #{basic_block1d.4} parent=35 // pred_check
        %p726 = pneg %p124
      $region38: #{basic_block1d.4} parent=35 // pred_check_branch
        %728 = sbr.rel (%p726) target = $region40
      $region39: #{basic_block1d.4} parent=35 // pred_region
        _
      $region40: #{basic_block1d.4} parent=35 // pred_fallthru
        _
      // Predicated region
      $region41: #{basic_block1d.4} parent=35 // pred_check
        %p729 = pneg %p150
      $region42: #{basic_block1d.4} parent=35 // pred_check_branch
        %731 = sbr.rel (%p729) target = $region44
      $region43: #{basic_block1d.4} parent=35 // pred_region
        _
      $region44: #{basic_block1d.4} parent=35 // pred_fallthru
        _
    $region36: #{basic_block1d.4} parent=5 // pred_fallthru
      _
    %p732 = scmp.le.s32.totalorder 2, %s12
    // Predicated region
    $region45: #{basic_block1d.4} parent=5 // pred_check
      %p733 = pneg %p732
    $region46: #{basic_block1d.4} parent=5 // pred_check_branch
      %735 = sbr.rel (%p733) target = $region48
    $region47: #{basic_block1d.4} parent=5 // pred_region
      %s736 = ssub.s32 %s12, 2
      // Predicated region
      $region49: #{basic_block1d.4} parent=47 // pred_check
        %p737 = pneg %p130
      $region50: #{basic_block1d.4} parent=47 // pred_check_branch
        %739 = sbr.rel (%p737) target = $region52
      $region51: #{basic_block1d.4} parent=47 // pred_region
        %p740 = scmp.lt.s32.totalorder %s18, 1
        %s741 = scalar_select %p740, %s18, 1
        %s742 = smul.addr %s741, 2
        %s743 = smul.addr %s742, 4
        %s744 = scalar_lea.vmem %s4, %s743
      $region52: #{basic_block1d.4} parent=47 // pred_fallthru
        _
      // Predicated region
      $region53: #{basic_block1d.4} parent=47 // pred_check
        %p745 = pneg %p156
      $region54: #{basic_block1d.4} parent=47 // pred_check_branch
        %747 = sbr.rel (%p745) target = $region56
      $region55: #{basic_block1d.4} parent=47 // pred_region
        %p748 = scmp.lt.s32.totalorder %s18, 1
        %s749 = scalar_select %p748, %s18, 1
        %s750 = smul.addr %s749, 2
        %s751 = scalar_lea.vmem %s5, %s750
      $region56: #{basic_block1d.4} parent=47 // pred_fallthru
        _
    $region48: #{basic_block1d.4} parent=5 // pred_fallthru
      _
  $region6: #{basic_block1d.4} parent=0 // loop_footer
    %s16 = sadd.s32 1, %s12
  $region7: #{basic_block1d.4} parent=0 // loop_footer_branch
    %11 = sbr.rel target = $region3
  $region8: #{basic_block1d.4} parent=0 // loop_exit
    _

</llo_original>
